<compile_context>
chip_gen: v6e
topology: v6e:2x2x1
jax: 0.10.0
libtpu: 0.0.40
codegen_flags: <defaults>
</compile_context>

<pallas_src>
import functools

import jax
import jax.numpy as jnp
from jax import lax
from jax.experimental import pallas as pl
from jax.experimental.pallas import tpu as pltpu
import numpy as np


def _round_up(x, m):
    return (x + m - 1) // m * m


_BATCH_ALIGN = 16  # bf16 sublane packing; also satisfies the f32 (8) sublane rule


def _choose_batch_tile(batch, block_batch):
    """Sublane-aligned batch tile, capped at block_batch; ensures >=2 tiles when the
    batch is large enough so the 'parallel' axis can shard across TensorCores."""
    tb = _round_up(min(batch, block_batch), _BATCH_ALIGN)
    if batch >= 2 * _BATCH_ALIGN and -(-batch // tb) < 2:
        tb = min(tb, _round_up((batch + 1) // 2, _BATCH_ALIGN))
    return tb


def _padded_tile_bytes(shape, dtype):
    """VMEM footprint of one tile incl. (8, 128) layout padding."""
    shape = tuple(int(s) for s in shape)
    if len(shape) == 1:
        shape = (1,) + shape
    lead = int(np.prod(shape[:-2], dtype=np.int64)) if len(shape) > 2 else 1
    sub = _round_up(shape[-2], 8)
    lane = _round_up(shape[-1], 128)
    return int(lead * sub * lane * jnp.dtype(dtype).itemsize)


def _disc_rnn_kernel(*refs, num_layers, seq_len, hidden):
    """One batch tile: multi-layer packed RNN, everything VMEM-resident.

    refs = (x, lengths, h0,
            w_ih0, w_hh0, b0,                 # layer 0 (input projection hoisted)
            [w_cat_l, b_l] for l=1..L-1,      # fused [W_ih; W_hh] per deeper layer
            o,                                # (seq, tb, H) bf16 masked last-layer output
            z0)                               # VMEM scratch (seq*tb, H) f32
    """
    x_ref, len_ref, h0_ref = refs[0], refs[1], refs[2]
    w_ih0_ref, w_hh0_ref, b0_ref = refs[3], refs[4], refs[5]
    fused_refs = refs[6:6 + 2 * (num_layers - 1)]
    o_ref = refs[6 + 2 * (num_layers - 1)]
    z0_ref = refs[7 + 2 * (num_layers - 1)]

    tb = x_ref.shape[1]
    in_size = x_ref.shape[2]

    # ---- hoisted layer-0 input projection: one MXU-friendly GEMM over seq*tb rows.
    x2d = x_ref[...].reshape(seq_len * tb, in_size)                    # bf16
    z0_ref[...] = (jnp.dot(x2d, w_ih0_ref[...],
                           preferred_element_type=jnp.float32)
                   + b0_ref[...])                                      # bias folded, f32

    lengths = len_ref[...]                                             # (tb, 1) int32
    zeros_h = jnp.zeros((tb, hidden), dtype=jnp.bfloat16)              # hoisted broadcast

    def step(t, hs):
        mask = lengths > t                                             # (tb, 1) valid mask
        # layer 0: recurrent matmul only (input projection already in z0 scratch)
        row = pl.multiple_of(t * tb, tb)
        z = z0_ref[pl.ds(row, tb), :] + jnp.dot(
            hs[0], w_hh0_ref[...], preferred_element_type=jnp.float32)
        h_new = jnp.tanh(z).astype(jnp.bfloat16)                       # f32 tanh (EUP)
        new_hs = [jnp.where(mask, h_new, hs[0])]                       # freeze past length
        inp = jnp.where(mask, h_new, zeros_h)                          # packed-seq zeros
        # deeper layers: one fused [inp, h] @ [W_ih; W_hh] matmul per layer
        for l in range(1, num_layers):
            w_cat_ref = fused_refs[2 * (l - 1)]
            b_ref = fused_refs[2 * (l - 1) + 1]
            xh = jnp.concatenate([inp, hs[l]], axis=-1)                # (tb, 2H) bf16
            z = jnp.dot(xh, w_cat_ref[...],
                        preferred_element_type=jnp.float32) + b_ref[...]
            h_new = jnp.tanh(z).astype(jnp.bfloat16)
            new_hs.append(jnp.where(mask, h_new, hs[l]))
            inp = jnp.where(mask, h_new, zeros_h)
        # masked last-layer hidden; output Linear is applied in the wrapper (lane-dense)
        o_ref[t] = inp
        return tuple(new_hs)

    hs0 = tuple(h0_ref[l].astype(jnp.bfloat16) for l in range(num_layers))
    unroll = True if seq_len <= 16 else 4     # partial unroll -> scheduler overlap
    lax.fori_loop(0, seq_len, step, hs0, unroll=unroll)


def disc_rnn_forward(X, X_lengths, h0, params, *, block_batch=128):
    """DiscRNN.forward.  X: (B, seq, in) f32, X_lengths: (B,) int, h0: (L, B, H) f32.
    Returns Y_hat: (B, seq, out) f32."""
    layers, (w_out, b_out) = params
    num_layers = len(layers)
    batch, seq_len, in_size = X.shape
    hidden = layers[0][0].shape[1]
    out_size = w_out.shape[1]

    # ---- batch tiling: one "parallel" grid axis over batch tiles ------------------
    tb = _choose_batch_tile(batch, block_batch)
    batch_p = _round_up(batch, tb)
    n_tiles = batch_p // tb

    # ---- host-side packing: time-major bf16 activations, length-0 padding rows ----
    x = jnp.pad(X.astype(jnp.bfloat16), ((0, batch_p - batch), (0, 0), (0, 0)))
    x = jnp.transpose(x, (1, 0, 2))                                    # (seq, batch_p, in)
    lens = jnp.pad(X_lengths.astype(jnp.int32),
                   (0, batch_p - batch)).reshape(batch_p, 1)           # pad rows -> len 0
    h0p = jnp.pad(h0.astype(jnp.float32),
                  ((0, 0), (0, batch_p - batch), (0, 0)))

    # weights: layer 0 split (input proj hoisted); deeper layers fused [W_ih; W_hh]
    w_ih0, w_hh0, b_ih0, b_hh0 = layers[0]
    flat_w = [w_ih0.astype(jnp.bfloat16), w_hh0.astype(jnp.bfloat16),
              (b_ih0 + b_hh0).astype(jnp.float32)]
    for (w_ih, w_hh, b_ih, b_hh) in layers[1:]:
        flat_w.append(jnp.concatenate([w_ih, w_hh], axis=0).astype(jnp.bfloat16))
        flat_w.append((b_ih + b_hh).astype(jnp.float32))

    kernel = functools.partial(_disc_rnn_kernel, num_layers=num_layers,
                               seq_len=seq_len, hidden=hidden)

    # Weights pinned to block (0, 0): DMA'd once, VMEM-resident across all tiles.
    _pin2d = lambda i: (0, 0)
    in_specs = [
        pl.BlockSpec((seq_len, tb, in_size), lambda i: (0, i, 0)),
        pl.BlockSpec((tb, 1), lambda i: (i, 0)),
        pl.BlockSpec((num_layers, tb, hidden), lambda i: (0, i, 0)),
    ] + [pl.BlockSpec(w.shape, _pin2d) for w in flat_w]
    out_spec = pl.BlockSpec((seq_len, tb, hidden), lambda i: (0, i, 0))

    # ---- VMEM budget (padded tiles, double-buffered) and cost estimate ------------
    io_tiles = [((seq_len, tb, in_size), jnp.bfloat16),
                ((tb, 1), jnp.int32),
                ((num_layers, tb, hidden), jnp.float32),
                ((seq_len, tb, hidden), jnp.bfloat16)]                 # output tile
    vmem_est = 2 * sum(_padded_tile_bytes(s, d) for s, d in io_tiles)
    vmem_est += 2 * sum(_padded_tile_bytes(w.shape, w.dtype) for w in flat_w)
    vmem_est += _padded_tile_bytes((seq_len * tb, hidden), jnp.float32)  # z0 scratch
    vmem_limit = int(min(max(2 * vmem_est, 32 * 1024 * 1024), 64 * 1024 * 1024))

    flops = 2 * seq_len * batch_p * (in_size * hidden                   # hoisted input proj
                                     + hidden * hidden                  # layer-0 recurrence
                                     + (num_layers - 1) * 2 * hidden * hidden)
    cost = pl.CostEstimate(
        flops=int(flops),
        transcendentals=int(seq_len * batch_p * hidden * num_layers),
        bytes_accessed=int(x.size * 2 + lens.size * 4 + h0p.size * 4
                           + sum(int(w.size) * w.dtype.itemsize for w in flat_w)
                           + seq_len * batch_p * hidden * 2))

    out_t = pl.pallas_call(
        kernel,
        grid=(n_tiles,),
        in_specs=in_specs,
        out_specs=out_spec,
        out_shape=jax.ShapeDtypeStruct((seq_len, batch_p, hidden), jnp.bfloat16),
        scratch_shapes=[pltpu.VMEM((seq_len * tb, hidden), jnp.float32)],
        compiler_params=pltpu.CompilerParams(
            dimension_semantics=("parallel",),        # shard batch tiles across TCs
            vmem_limit_bytes=vmem_limit),
        cost_estimate=cost,
    )(x, lens, h0p, *flat_w)

    # Fused, lane-dense output Linear in the wrapper: (B*seq, H) x (H, out) single GEMM;
    # the (seq, B) -> (B, seq) layout change is folded into the dot by XLA.
    h_seq = jnp.transpose(out_t, (1, 0, 2))[:batch]                    # (B, seq, H) bf16
    y = (jnp.dot(h_seq.reshape(batch * seq_len, hidden),
                 w_out.astype(jnp.bfloat16),
                 preferred_element_type=jnp.float32)
         + b_out.astype(jnp.float32))
    # Padded timesteps were zeroed in the kernel -> those rows become exactly b_out,
    # matching nn.Linear applied to the pad_packed_sequence zeros in PyTorch.
    return y.reshape(batch, seq_len, out_size)


def init_params(key, in_size, net_arch, out_size):
    """PyTorch-style init. RNN weights/biases ~ U(-1/sqrt(H), 1/sqrt(H)); Linear likewise."""
    hidden = net_arch[0]
    num_layers = len(net_arch)
    k = 1.0 / np.sqrt(hidden)
    layers = []
    for l in range(num_layers):
        in_l = in_size if l == 0 else hidden
        key, k1, k2, k3, k4 = jax.random.split(key, 5)
        w_ih = jax.random.uniform(k1, (in_l, hidden), jnp.float32, -k, k)
        w_hh = jax.random.uniform(k2, (hidden, hidden), jnp.float32, -k, k)
        b_ih = jax.random.uniform(k3, (1, hidden), jnp.float32, -k, k)
        b_hh = jax.random.uniform(k4, (1, hidden), jnp.float32, -k, k)
        layers.append((w_ih, w_hh, b_ih, b_hh))
    key, k1, k2 = jax.random.split(key, 3)
    w_out = jax.random.uniform(k1, (hidden, out_size), jnp.float32, -k, k)
    b_out = jax.random.uniform(k2, (1, out_size), jnp.float32, -k, k)
    return (tuple(layers), (w_out, b_out))


def _ref_forward(X, X_lengths, h0, params):
    """Pure-JAX reference mirroring the kernel's numerics (bf16 matmul operands,
    f32 accumulation, packed-sequence masking, padded positions -> b_out)."""
    layers, (w_out, b_out) = params
    batch, seq_len, _ = X.shape
    hidden = layers[0][0].shape[1]
    out_size = w_out.shape[1]
    x = X.astype(jnp.bfloat16)
    hs = [h0[l].astype(jnp.float32) for l in range(len(layers))]
    outs = []
    for t in range(seq_len):
        mask = (X_lengths > t)[:, None]
        inp = x[:, t, :]
        for l, (w_ih, w_hh, b_ih, b_hh) in enumerate(layers):
            z = (jnp.dot(inp, w_ih.astype(jnp.bfloat16),
                         preferred_element_type=jnp.float32)
                 + jnp.dot(hs[l].astype(jnp.bfloat16), w_hh.astype(jnp.bfloat16),
                           preferred_element_type=jnp.float32)
                 + (b_ih + b_hh))
            h_new = jnp.tanh(z)
            hs[l] = jnp.where(mask, h_new, hs[l])
            inp = jnp.where(mask, h_new, 0.0).astype(jnp.bfloat16)
        outs.append(inp)
    hseq = jnp.stack(outs, axis=1).reshape(batch * seq_len, hidden)
    y = jnp.dot(hseq, w_out.astype(jnp.bfloat16),
                preferred_element_type=jnp.float32) + b_out
    return y.reshape(batch, seq_len, out_size)


if __name__ == "__main__":
    # DiscRNN(in_size=16, out_size=8, net_arch=[32, 32], gate_type='Rnn')
    in_size, out_size = 16, 8
    net_arch = [32, 32]           # 2 RNN layers, 32 hidden units
    batch, seq_len = 6, 8

    key = jax.random.PRNGKey(0)
    kx, kh, kp = jax.random.split(key, 3)
    X = jax.random.normal(kx, (batch, seq_len, in_size), jnp.float32)
    X_lengths = jnp.array([8, 5, 3, 8, 1, 6], dtype=jnp.int32)
    # init_hidden() uses torch.randn; here it is an explicit deterministic input.
    h0 = jax.random.normal(kh, (len(net_arch), batch, net_arch[0]), jnp.float32)
    params = init_params(kp, in_size, net_arch, out_size)

    out = disc_rnn_forward(X, X_lengths, h0, params)
    out = jax.block_until_ready(out)

    ref = _ref_forward(X, X_lengths, h0, params)
    assert out.shape == (batch, seq_len, out_size)
    assert np.allclose(np.asarray(out), np.asarray(ref), atol=2e-3, rtol=2e-3)
    print("KERNEL_OK")
</pallas_src>

<mosaic_0001>
module attributes {stable_mosaic.version = 11 : i64} {
  func.func @_disc_rnn_kernel(%arg0: i32, %arg1: memref<8x16x16xbf16, #tpu.memory_space<vmem>>, %arg2: memref<16x1xi32, #tpu.memory_space<vmem>>, %arg3: memref<2x16x32xf32, #tpu.memory_space<vmem>>, %arg4: memref<16x32xbf16, #tpu.memory_space<vmem>>, %arg5: memref<32x32xbf16, #tpu.memory_space<vmem>>, %arg6: memref<1x32xf32, #tpu.memory_space<vmem>>, %arg7: memref<64x32xbf16, #tpu.memory_space<vmem>>, %arg8: memref<1x32xf32, #tpu.memory_space<vmem>>, %arg9: memref<8x16x32xbf16, #tpu.memory_space<vmem>>, %arg10: memref<128x32xf32, #tpu.memory_space<vmem>>) attributes {dimension_semantics = [#tpu.dimension_semantics<parallel>], iteration_bounds = array<i64: 1>, scalar_prefetch = 0 : i64, scratch_operands = 1 : i64, tpu.core_type = #tpu.core_type<tc>, window_params = [{transform_indices = @transform_0, window_bounds = array<i64: 8, 16, 16>}, {transform_indices = @transform_1, window_bounds = array<i64: 16, 1>}, {transform_indices = @transform_2, window_bounds = array<i64: 2, 16, 32>}, {pipeline_mode = #tpu.pipeline_mode<synchronous>, transform_indices = @transform_3, window_bounds = array<i64: 16, 32>}, {pipeline_mode = #tpu.pipeline_mode<synchronous>, transform_indices = @transform_4, window_bounds = array<i64: 32, 32>}, {pipeline_mode = #tpu.pipeline_mode<synchronous>, transform_indices = @transform_5, window_bounds = array<i64: 1, 32>}, {pipeline_mode = #tpu.pipeline_mode<synchronous>, transform_indices = @transform_6, window_bounds = array<i64: 64, 32>}, {pipeline_mode = #tpu.pipeline_mode<synchronous>, transform_indices = @transform_7, window_bounds = array<i64: 1, 32>}, {transform_indices = @transform_8, window_bounds = array<i64: 8, 16, 32>}]} {
    %c0 = arith.constant 0 : index
    %c0_0 = arith.constant 0 : index
    %c0_1 = arith.constant 0 : index
    %0 = vector.load %arg1[%c0, %c0_0, %c0_1] : memref<8x16x16xbf16, #tpu.memory_space<vmem>>, vector<8x16x16xbf16>
    %1 = vector.shape_cast %0 : vector<8x16x16xbf16> to vector<128x16xbf16>
    %c0_2 = arith.constant 0 : index
    %c0_3 = arith.constant 0 : index
    %2 = vector.load %arg4[%c0_2, %c0_3] : memref<16x32xbf16, #tpu.memory_space<vmem>>, vector<16x32xbf16>
    %cst = arith.constant dense<0.000000e+00> : vector<128x32xf32>
    %3 = tpu.matmul %1, %2, %cst {dimension_numbers = #tpu.dot_dimension_numbers<[1], [0], [0], [1], [0, 0, 1, 1], [], []>} : vector<128x16xbf16>, vector<16x32xbf16>, vector<128x32xf32> -> vector<128x32xf32>
    %c0_4 = arith.constant 0 : index
    %c0_5 = arith.constant 0 : index
    %4 = vector.load %arg6[%c0_4, %c0_5] : memref<1x32xf32, #tpu.memory_space<vmem>>, vector<1x32xf32>
    %5 = vector.broadcast %4 : vector<1x32xf32> to vector<128x32xf32>
    %6 = arith.addf %3, %5 : vector<128x32xf32>
    %c0_6 = arith.constant 0 : index
    %c0_7 = arith.constant 0 : index
    %7 = vector.load %arg10[%c0_6, %c0_7] : memref<128x32xf32, #tpu.memory_space<vmem>>, vector<128x32xf32>
    tpu.vector_store %arg10[%c0_6, %c0_7], %6 {strides = array<i32>} : memref<128x32xf32, #tpu.memory_space<vmem>>, vector<128x32xf32>,
    %c0_8 = arith.constant 0 : index
    %c0_9 = arith.constant 0 : index
    %8 = vector.load %arg2[%c0_8, %c0_9] : memref<16x1xi32, #tpu.memory_space<vmem>>, vector<16x1xi32>
    %cst_10 = arith.constant 0.000000e+00 : bf16
    %9 = vector.broadcast %cst_10 : bf16 to vector<16x32xbf16>
    %c0_11 = arith.constant 0 : index
    %c0_12 = arith.constant 0 : index
    %c0_13 = arith.constant 0 : index
    %10 = vector.load %arg3[%c0_11, %c0_12, %c0_13] : memref<2x16x32xf32, #tpu.memory_space<vmem>>, vector<1x16x32xf32>
    %11 = vector.shape_cast %10 : vector<1x16x32xf32> to vector<16x32xf32>
    %12 = arith.truncf %11 : vector<16x32xf32> to vector<16x32xbf16>
    %c1 = arith.constant 1 : index
    %c0_14 = arith.constant 0 : index
    %c0_15 = arith.constant 0 : index
    %13 = vector.load %arg3[%c1, %c0_14, %c0_15] : memref<2x16x32xf32, #tpu.memory_space<vmem>>, vector<1x16x32xf32>
    %14 = vector.shape_cast %13 : vector<1x16x32xf32> to vector<16x32xf32>
    %15 = arith.truncf %14 : vector<16x32xf32> to vector<16x32xbf16>
    %c0_i32 = arith.constant 0 : i32
    %16 = vector.broadcast %c0_i32 : i32 to vector<16x1xi32>
    %17 = arith.cmpi sgt, %8, %16 : vector<16x1xi32>
    %c16_i32 = arith.constant 16 : i32
    %18 = arith.muli %c0_i32, %c16_i32 : i32
    %19 = tpu.assume_multiple %18, 16 : i32
    %20 = arith.index_cast %19 : i32 to index
    %c0_16 = arith.constant 0 : index
    %21 = vector.load %arg10[%20, %c0_16] : memref<128x32xf32, #tpu.memory_space<vmem>>, vector<16x32xf32>
    %c0_17 = arith.constant 0 : index
    %c0_18 = arith.constant 0 : index
    %22 = vector.load %arg5[%c0_17, %c0_18] : memref<32x32xbf16, #tpu.memory_space<vmem>>, vector<32x32xbf16>
    %cst_19 = arith.constant dense<0.000000e+00> : vector<16x32xf32>
    %23 = tpu.matmul %12, %22, %cst_19 {dimension_numbers = #tpu.dot_dimension_numbers<[1], [0], [0], [1], [0, 0, 1, 1], [], []>} : vector<16x32xbf16>, vector<32x32xbf16>, vector<16x32xf32> -> vector<16x32xf32>
    %24 = arith.addf %21, %23 : vector<16x32xf32>
    %25 = math.tanh %24 : vector<16x32xf32>
    %26 = arith.truncf %25 : vector<16x32xf32> to vector<16x32xbf16>
    %27 = vector.shape_cast %17 : vector<16x1xi1> to vector<16x1xi1>
    %28 = vector.broadcast %27 : vector<16x1xi1> to vector<16x32xi1>
    %29 = arith.select %28, %26, %12 : vector<16x32xi1>, vector<16x32xbf16>
    %30 = vector.shape_cast %17 : vector<16x1xi1> to vector<16x1xi1>
    %31 = vector.broadcast %30 : vector<16x1xi1> to vector<16x32xi1>
    %32 = arith.select %31, %26, %9 : vector<16x32xi1>, vector<16x32xbf16>
    %33 = tpu.concatenate %32, %15 in 1 : vector<16x32xbf16>, vector<16x32xbf16> -> vector<16x64xbf16>
    %c0_20 = arith.constant 0 : index
    %c0_21 = arith.constant 0 : index
    %34 = vector.load %arg7[%c0_20, %c0_21] : memref<64x32xbf16, #tpu.memory_space<vmem>>, vector<64x32xbf16>
    %cst_22 = arith.constant dense<0.000000e+00> : vector<16x32xf32>
    %35 = tpu.matmul %33, %34, %cst_22 {dimension_numbers = #tpu.dot_dimension_numbers<[1], [0], [0], [1], [0, 0, 1, 1], [], []>} : vector<16x64xbf16>, vector<64x32xbf16>, vector<16x32xf32> -> vector<16x32xf32>
    %c0_23 = arith.constant 0 : index
    %c0_24 = arith.constant 0 : index
    %36 = vector.load %arg8[%c0_23, %c0_24] : memref<1x32xf32, #tpu.memory_space<vmem>>, vector<1x32xf32>
    %37 = vector.broadcast %36 : vector<1x32xf32> to vector<16x32xf32>
    %38 = arith.addf %35, %37 : vector<16x32xf32>
    %39 = math.tanh %38 : vector<16x32xf32>
    %40 = arith.truncf %39 : vector<16x32xf32> to vector<16x32xbf16>
    %41 = vector.shape_cast %17 : vector<16x1xi1> to vector<16x1xi1>
    %42 = vector.broadcast %41 : vector<16x1xi1> to vector<16x32xi1>
    %43 = arith.select %42, %40, %15 : vector<16x32xi1>, vector<16x32xbf16>
    %44 = vector.shape_cast %17 : vector<16x1xi1> to vector<16x1xi1>
    %45 = vector.broadcast %44 : vector<16x1xi1> to vector<16x32xi1>
    %46 = arith.select %45, %40, %9 : vector<16x32xi1>, vector<16x32xbf16>
    %47 = arith.index_cast %c0_i32 : i32 to index
    %c0_25 = arith.constant 0 : index
    %c0_26 = arith.constant 0 : index
    %48 = vector.load %arg9[%47, %c0_25, %c0_26] : memref<8x16x32xbf16, #tpu.memory_space<vmem>>, vector<1x16x32xbf16>
    %49 = vector.shape_cast %48 : vector<1x16x32xbf16> to vector<16x32xbf16>
    %50 = vector.shape_cast %46 : vector<16x32xbf16> to vector<1x16x32xbf16>
    tpu.vector_store %arg9[%47, %c0_25, %c0_26], %50 {strides = array<i32>} : memref<8x16x32xbf16, #tpu.memory_space<vmem>>, vector<1x16x32xbf16>,
    %c1_i32 = arith.constant 1 : i32
    %51 = vector.broadcast %c1_i32 : i32 to vector<16x1xi32>
    %52 = arith.cmpi sgt, %8, %51 : vector<16x1xi32>
    %c16_i32_27 = arith.constant 16 : i32
    %53 = arith.muli %c1_i32, %c16_i32_27 : i32
    %54 = tpu.assume_multiple %53, 16 : i32
    %55 = arith.index_cast %54 : i32 to index
    %c0_28 = arith.constant 0 : index
    %56 = vector.load %arg10[%55, %c0_28] : memref<128x32xf32, #tpu.memory_space<vmem>>, vector<16x32xf32>
    %c0_29 = arith.constant 0 : index
    %c0_30 = arith.constant 0 : index
    %57 = vector.load %arg5[%c0_29, %c0_30] : memref<32x32xbf16, #tpu.memory_space<vmem>>, vector<32x32xbf16>
    %cst_31 = arith.constant dense<0.000000e+00> : vector<16x32xf32>
    %58 = tpu.matmul %29, %57, %cst_31 {dimension_numbers = #tpu.dot_dimension_numbers<[1], [0], [0], [1], [0, 0, 1, 1], [], []>} : vector<16x32xbf16>, vector<32x32xbf16>, vector<16x32xf32> -> vector<16x32xf32>
    %59 = arith.addf %56, %58 : vector<16x32xf32>
    %60 = math.tanh %59 : vector<16x32xf32>
    %61 = arith.truncf %60 : vector<16x32xf32> to vector<16x32xbf16>
    %62 = vector.shape_cast %52 : vector<16x1xi1> to vector<16x1xi1>
    %63 = vector.broadcast %62 : vector<16x1xi1> to vector<16x32xi1>
    %64 = arith.select %63, %61, %29 : vector<16x32xi1>, vector<16x32xbf16>
    %65 = vector.shape_cast %52 : vector<16x1xi1> to vector<16x1xi1>
    %66 = vector.broadcast %65 : vector<16x1xi1> to vector<16x32xi1>
    %67 = arith.select %66, %61, %9 : vector<16x32xi1>, vector<16x32xbf16>
    %68 = tpu.concatenate %67, %43 in 1 : vector<16x32xbf16>, vector<16x32xbf16> -> vector<16x64xbf16>
    %c0_32 = arith.constant 0 : index
    %c0_33 = arith.constant 0 : index
    %69 = vector.load %arg7[%c0_32, %c0_33] : memref<64x32xbf16, #tpu.memory_space<vmem>>, vector<64x32xbf16>
    %cst_34 = arith.constant dense<0.000000e+00> : vector<16x32xf32>
    %70 = tpu.matmul %68, %69, %cst_34 {dimension_numbers = #tpu.dot_dimension_numbers<[1], [0], [0], [1], [0, 0, 1, 1], [], []>} : vector<16x64xbf16>, vector<64x32xbf16>, vector<16x32xf32> -> vector<16x32xf32>
    %c0_35 = arith.constant 0 : index
    %c0_36 = arith.constant 0 : index
    %71 = vector.load %arg8[%c0_35, %c0_36] : memref<1x32xf32, #tpu.memory_space<vmem>>, vector<1x32xf32>
    %72 = vector.broadcast %71 : vector<1x32xf32> to vector<16x32xf32>
    %73 = arith.addf %70, %72 : vector<16x32xf32>
    %74 = math.tanh %73 : vector<16x32xf32>
    %75 = arith.truncf %74 : vector<16x32xf32> to vector<16x32xbf16>
    %76 = vector.shape_cast %52 : vector<16x1xi1> to vector<16x1xi1>
    %77 = vector.broadcast %76 : vector<16x1xi1> to vector<16x32xi1>
    %78 = arith.select %77, %75, %43 : vector<16x32xi1>, vector<16x32xbf16>
    %79 = vector.shape_cast %52 : vector<16x1xi1> to vector<16x1xi1>
    %80 = vector.broadcast %79 : vector<16x1xi1> to vector<16x32xi1>
    %81 = arith.select %80, %75, %9 : vector<16x32xi1>, vector<16x32xbf16>
    %82 = arith.index_cast %c1_i32 : i32 to index
    %c0_37 = arith.constant 0 : index
    %c0_38 = arith.constant 0 : index
    %83 = vector.load %arg9[%82, %c0_37, %c0_38] : memref<8x16x32xbf16, #tpu.memory_space<vmem>>, vector<1x16x32xbf16>
    %84 = vector.shape_cast %83 : vector<1x16x32xbf16> to vector<16x32xbf16>
    %85 = vector.shape_cast %81 : vector<16x32xbf16> to vector<1x16x32xbf16>
    tpu.vector_store %arg9[%82, %c0_37, %c0_38], %85 {strides = array<i32>} : memref<8x16x32xbf16, #tpu.memory_space<vmem>>, vector<1x16x32xbf16>,
    %c2_i32 = arith.constant 2 : i32
    %86 = vector.broadcast %c2_i32 : i32 to vector<16x1xi32>
    %87 = arith.cmpi sgt, %8, %86 : vector<16x1xi32>
    %c16_i32_39 = arith.constant 16 : i32
    %88 = arith.muli %c2_i32, %c16_i32_39 : i32
    %89 = tpu.assume_multiple %88, 16 : i32
    %90 = arith.index_cast %89 : i32 to index
    %c0_40 = arith.constant 0 : index
    %91 = vector.load %arg10[%90, %c0_40] : memref<128x32xf32, #tpu.memory_space<vmem>>, vector<16x32xf32>
    %c0_41 = arith.constant 0 : index
    %c0_42 = arith.constant 0 : index
    %92 = vector.load %arg5[%c0_41, %c0_42] : memref<32x32xbf16, #tpu.memory_space<vmem>>, vector<32x32xbf16>
    %cst_43 = arith.constant dense<0.000000e+00> : vector<16x32xf32>
    %93 = tpu.matmul %64, %92, %cst_43 {dimension_numbers = #tpu.dot_dimension_numbers<[1], [0], [0], [1], [0, 0, 1, 1], [], []>} : vector<16x32xbf16>, vector<32x32xbf16>, vector<16x32xf32> -> vector<16x32xf32>
    %94 = arith.addf %91, %93 : vector<16x32xf32>
    %95 = math.tanh %94 : vector<16x32xf32>
    %96 = arith.truncf %95 : vector<16x32xf32> to vector<16x32xbf16>
    %97 = vector.shape_cast %87 : vector<16x1xi1> to vector<16x1xi1>
    %98 = vector.broadcast %97 : vector<16x1xi1> to vector<16x32xi1>
    %99 = arith.select %98, %96, %64 : vector<16x32xi1>, vector<16x32xbf16>
    %100 = vector.shape_cast %87 : vector<16x1xi1> to vector<16x1xi1>
    %101 = vector.broadcast %100 : vector<16x1xi1> to vector<16x32xi1>
    %102 = arith.select %101, %96, %9 : vector<16x32xi1>, vector<16x32xbf16>
    %103 = tpu.concatenate %102, %78 in 1 : vector<16x32xbf16>, vector<16x32xbf16> -> vector<16x64xbf16>
    %c0_44 = arith.constant 0 : index
    %c0_45 = arith.constant 0 : index
    %104 = vector.load %arg7[%c0_44, %c0_45] : memref<64x32xbf16, #tpu.memory_space<vmem>>, vector<64x32xbf16>
    %cst_46 = arith.constant dense<0.000000e+00> : vector<16x32xf32>
    %105 = tpu.matmul %103, %104, %cst_46 {dimension_numbers = #tpu.dot_dimension_numbers<[1], [0], [0], [1], [0, 0, 1, 1], [], []>} : vector<16x64xbf16>, vector<64x32xbf16>, vector<16x32xf32> -> vector<16x32xf32>
    %c0_47 = arith.constant 0 : index
    %c0_48 = arith.constant 0 : index
    %106 = vector.load %arg8[%c0_47, %c0_48] : memref<1x32xf32, #tpu.memory_space<vmem>>, vector<1x32xf32>
    %107 = vector.broadcast %106 : vector<1x32xf32> to vector<16x32xf32>
    %108 = arith.addf %105, %107 : vector<16x32xf32>
    %109 = math.tanh %108 : vector<16x32xf32>
    %110 = arith.truncf %109 : vector<16x32xf32> to vector<16x32xbf16>
    %111 = vector.shape_cast %87 : vector<16x1xi1> to vector<16x1xi1>
    %112 = vector.broadcast %111 : vector<16x1xi1> to vector<16x32xi1>
    %113 = arith.select %112, %110, %78 : vector<16x32xi1>, vector<16x32xbf16>
    %114 = vector.shape_cast %87 : vector<16x1xi1> to vector<16x1xi1>
    %115 = vector.broadcast %114 : vector<16x1xi1> to vector<16x32xi1>
    %116 = arith.select %115, %110, %9 : vector<16x32xi1>, vector<16x32xbf16>
    %117 = arith.index_cast %c2_i32 : i32 to index
    %c0_49 = arith.constant 0 : index
    %c0_50 = arith.constant 0 : index
    %118 = vector.load %arg9[%117, %c0_49, %c0_50] : memref<8x16x32xbf16, #tpu.memory_space<vmem>>, vector<1x16x32xbf16>
    %119 = vector.shape_cast %118 : vector<1x16x32xbf16> to vector<16x32xbf16>
    %120 = vector.shape_cast %116 : vector<16x32xbf16> to vector<1x16x32xbf16>
    tpu.vector_store %arg9[%117, %c0_49, %c0_50], %120 {strides = array<i32>} : memref<8x16x32xbf16, #tpu.memory_space<vmem>>, vector<1x16x32xbf16>,
    %c3_i32 = arith.constant 3 : i32
    %121 = vector.broadcast %c3_i32 : i32 to vector<16x1xi32>
    %122 = arith.cmpi sgt, %8, %121 : vector<16x1xi32>
    %c16_i32_51 = arith.constant 16 : i32
    %123 = arith.muli %c3_i32, %c16_i32_51 : i32
    %124 = tpu.assume_multiple %123, 16 : i32
    %125 = arith.index_cast %124 : i32 to index
    %c0_52 = arith.constant 0 : index
    %126 = vector.load %arg10[%125, %c0_52] : memref<128x32xf32, #tpu.memory_space<vmem>>, vector<16x32xf32>
    %c0_53 = arith.constant 0 : index
    %c0_54 = arith.constant 0 : index
    %127 = vector.load %arg5[%c0_53, %c0_54] : memref<32x32xbf16, #tpu.memory_space<vmem>>, vector<32x32xbf16>
    %cst_55 = arith.constant dense<0.000000e+00> : vector<16x32xf32>
    %128 = tpu.matmul %99, %127, %cst_55 {dimension_numbers = #tpu.dot_dimension_numbers<[1], [0], [0], [1], [0, 0, 1, 1], [], []>} : vector<16x32xbf16>, vector<32x32xbf16>, vector<16x32xf32> -> vector<16x32xf32>
    %129 = arith.addf %126, %128 : vector<16x32xf32>
    %130 = math.tanh %129 : vector<16x32xf32>
    %131 = arith.truncf %130 : vector<16x32xf32> to vector<16x32xbf16>
    %132 = vector.shape_cast %122 : vector<16x1xi1> to vector<16x1xi1>
    %133 = vector.broadcast %132 : vector<16x1xi1> to vector<16x32xi1>
    %134 = arith.select %133, %131, %99 : vector<16x32xi1>, vector<16x32xbf16>
    %135 = vector.shape_cast %122 : vector<16x1xi1> to vector<16x1xi1>
    %136 = vector.broadcast %135 : vector<16x1xi1> to vector<16x32xi1>
    %137 = arith.select %136, %131, %9 : vector<16x32xi1>, vector<16x32xbf16>
    %138 = tpu.concatenate %137, %113 in 1 : vector<16x32xbf16>, vector<16x32xbf16> -> vector<16x64xbf16>
    %c0_56 = arith.constant 0 : index
    %c0_57 = arith.constant 0 : index
    %139 = vector.load %arg7[%c0_56, %c0_57] : memref<64x32xbf16, #tpu.memory_space<vmem>>, vector<64x32xbf16>
    %cst_58 = arith.constant dense<0.000000e+00> : vector<16x32xf32>
    %140 = tpu.matmul %138, %139, %cst_58 {dimension_numbers = #tpu.dot_dimension_numbers<[1], [0], [0], [1], [0, 0, 1, 1], [], []>} : vector<16x64xbf16>, vector<64x32xbf16>, vector<16x32xf32> -> vector<16x32xf32>
    %c0_59 = arith.constant 0 : index
    %c0_60 = arith.constant 0 : index
    %141 = vector.load %arg8[%c0_59, %c0_60] : memref<1x32xf32, #tpu.memory_space<vmem>>, vector<1x32xf32>
    %142 = vector.broadcast %141 : vector<1x32xf32> to vector<16x32xf32>
    %143 = arith.addf %140, %142 : vector<16x32xf32>
    %144 = math.tanh %143 : vector<16x32xf32>
    %145 = arith.truncf %144 : vector<16x32xf32> to vector<16x32xbf16>
    %146 = vector.shape_cast %122 : vector<16x1xi1> to vector<16x1xi1>
    %147 = vector.broadcast %146 : vector<16x1xi1> to vector<16x32xi1>
    %148 = arith.select %147, %145, %113 : vector<16x32xi1>, vector<16x32xbf16>
    %149 = vector.shape_cast %122 : vector<16x1xi1> to vector<16x1xi1>
    %150 = vector.broadcast %149 : vector<16x1xi1> to vector<16x32xi1>
    %151 = arith.select %150, %145, %9 : vector<16x32xi1>, vector<16x32xbf16>
    %152 = arith.index_cast %c3_i32 : i32 to index
    %c0_61 = arith.constant 0 : index
    %c0_62 = arith.constant 0 : index
    %153 = vector.load %arg9[%152, %c0_61, %c0_62] : memref<8x16x32xbf16, #tpu.memory_space<vmem>>, vector<1x16x32xbf16>
    %154 = vector.shape_cast %153 : vector<1x16x32xbf16> to vector<16x32xbf16>
    %155 = vector.shape_cast %151 : vector<16x32xbf16> to vector<1x16x32xbf16>
    tpu.vector_store %arg9[%152, %c0_61, %c0_62], %155 {strides = array<i32>} : memref<8x16x32xbf16, #tpu.memory_space<vmem>>, vector<1x16x32xbf16>,
    %c4_i32 = arith.constant 4 : i32
    %156 = vector.broadcast %c4_i32 : i32 to vector<16x1xi32>
    %157 = arith.cmpi sgt, %8, %156 : vector<16x1xi32>
    %c16_i32_63 = arith.constant 16 : i32
    %158 = arith.muli %c4_i32, %c16_i32_63 : i32
    %159 = tpu.assume_multiple %158, 16 : i32
    %160 = arith.index_cast %159 : i32 to index
    %c0_64 = arith.constant 0 : index
    %161 = vector.load %arg10[%160, %c0_64] : memref<128x32xf32, #tpu.memory_space<vmem>>, vector<16x32xf32>
    %c0_65 = arith.constant 0 : index
    %c0_66 = arith.constant 0 : index
    %162 = vector.load %arg5[%c0_65, %c0_66] : memref<32x32xbf16, #tpu.memory_space<vmem>>, vector<32x32xbf16>
    %cst_67 = arith.constant dense<0.000000e+00> : vector<16x32xf32>
    %163 = tpu.matmul %134, %162, %cst_67 {dimension_numbers = #tpu.dot_dimension_numbers<[1], [0], [0], [1], [0, 0, 1, 1], [], []>} : vector<16x32xbf16>, vector<32x32xbf16>, vector<16x32xf32> -> vector<16x32xf32>
    %164 = arith.addf %161, %163 : vector<16x32xf32>
    %165 = math.tanh %164 : vector<16x32xf32>
    %166 = arith.truncf %165 : vector<16x32xf32> to vector<16x32xbf16>
    %167 = vector.shape_cast %157 : vector<16x1xi1> to vector<16x1xi1>
    %168 = vector.broadcast %167 : vector<16x1xi1> to vector<16x32xi1>
    %169 = arith.select %168, %166, %134 : vector<16x32xi1>, vector<16x32xbf16>
    %170 = vector.shape_cast %157 : vector<16x1xi1> to vector<16x1xi1>
    %171 = vector.broadcast %170 : vector<16x1xi1> to vector<16x32xi1>
    %172 = arith.select %171, %166, %9 : vector<16x32xi1>, vector<16x32xbf16>
    %173 = tpu.concatenate %172, %148 in 1 : vector<16x32xbf16>, vector<16x32xbf16> -> vector<16x64xbf16>
    %c0_68 = arith.constant 0 : index
    %c0_69 = arith.constant 0 : index
    %174 = vector.load %arg7[%c0_68, %c0_69] : memref<64x32xbf16, #tpu.memory_space<vmem>>, vector<64x32xbf16>
    %cst_70 = arith.constant dense<0.000000e+00> : vector<16x32xf32>
    %175 = tpu.matmul %173, %174, %cst_70 {dimension_numbers = #tpu.dot_dimension_numbers<[1], [0], [0], [1], [0, 0, 1, 1], [], []>} : vector<16x64xbf16>, vector<64x32xbf16>, vector<16x32xf32> -> vector<16x32xf32>
    %c0_71 = arith.constant 0 : index
    %c0_72 = arith.constant 0 : index
    %176 = vector.load %arg8[%c0_71, %c0_72] : memref<1x32xf32, #tpu.memory_space<vmem>>, vector<1x32xf32>
    %177 = vector.broadcast %176 : vector<1x32xf32> to vector<16x32xf32>
    %178 = arith.addf %175, %177 : vector<16x32xf32>
    %179 = math.tanh %178 : vector<16x32xf32>
    %180 = arith.truncf %179 : vector<16x32xf32> to vector<16x32xbf16>
    %181 = vector.shape_cast %157 : vector<16x1xi1> to vector<16x1xi1>
    %182 = vector.broadcast %181 : vector<16x1xi1> to vector<16x32xi1>
    %183 = arith.select %182, %180, %148 : vector<16x32xi1>, vector<16x32xbf16>
    %184 = vector.shape_cast %157 : vector<16x1xi1> to vector<16x1xi1>
    %185 = vector.broadcast %184 : vector<16x1xi1> to vector<16x32xi1>
    %186 = arith.select %185, %180, %9 : vector<16x32xi1>, vector<16x32xbf16>
    %187 = arith.index_cast %c4_i32 : i32 to index
    %c0_73 = arith.constant 0 : index
    %c0_74 = arith.constant 0 : index
    %188 = vector.load %arg9[%187, %c0_73, %c0_74] : memref<8x16x32xbf16, #tpu.memory_space<vmem>>, vector<1x16x32xbf16>
    %189 = vector.shape_cast %188 : vector<1x16x32xbf16> to vector<16x32xbf16>
    %190 = vector.shape_cast %186 : vector<16x32xbf16> to vector<1x16x32xbf16>
    tpu.vector_store %arg9[%187, %c0_73, %c0_74], %190 {strides = array<i32>} : memref<8x16x32xbf16, #tpu.memory_space<vmem>>, vector<1x16x32xbf16>,
    %c5_i32 = arith.constant 5 : i32
    %191 = vector.broadcast %c5_i32 : i32 to vector<16x1xi32>
    %192 = arith.cmpi sgt, %8, %191 : vector<16x1xi32>
    %c16_i32_75 = arith.constant 16 : i32
    %193 = arith.muli %c5_i32, %c16_i32_75 : i32
    %194 = tpu.assume_multiple %193, 16 : i32
    %195 = arith.index_cast %194 : i32 to index
    %c0_76 = arith.constant 0 : index
    %196 = vector.load %arg10[%195, %c0_76] : memref<128x32xf32, #tpu.memory_space<vmem>>, vector<16x32xf32>
    %c0_77 = arith.constant 0 : index
    %c0_78 = arith.constant 0 : index
    %197 = vector.load %arg5[%c0_77, %c0_78] : memref<32x32xbf16, #tpu.memory_space<vmem>>, vector<32x32xbf16>
    %cst_79 = arith.constant dense<0.000000e+00> : vector<16x32xf32>
    %198 = tpu.matmul %169, %197, %cst_79 {dimension_numbers = #tpu.dot_dimension_numbers<[1], [0], [0], [1], [0, 0, 1, 1], [], []>} : vector<16x32xbf16>, vector<32x32xbf16>, vector<16x32xf32> -> vector<16x32xf32>
    %199 = arith.addf %196, %198 : vector<16x32xf32>
    %200 = math.tanh %199 : vector<16x32xf32>
    %201 = arith.truncf %200 : vector<16x32xf32> to vector<16x32xbf16>
    %202 = vector.shape_cast %192 : vector<16x1xi1> to vector<16x1xi1>
    %203 = vector.broadcast %202 : vector<16x1xi1> to vector<16x32xi1>
    %204 = arith.select %203, %201, %169 : vector<16x32xi1>, vector<16x32xbf16>
    %205 = vector.shape_cast %192 : vector<16x1xi1> to vector<16x1xi1>
    %206 = vector.broadcast %205 : vector<16x1xi1> to vector<16x32xi1>
    %207 = arith.select %206, %201, %9 : vector<16x32xi1>, vector<16x32xbf16>
    %208 = tpu.concatenate %207, %183 in 1 : vector<16x32xbf16>, vector<16x32xbf16> -> vector<16x64xbf16>
    %c0_80 = arith.constant 0 : index
    %c0_81 = arith.constant 0 : index
    %209 = vector.load %arg7[%c0_80, %c0_81] : memref<64x32xbf16, #tpu.memory_space<vmem>>, vector<64x32xbf16>
    %cst_82 = arith.constant dense<0.000000e+00> : vector<16x32xf32>
    %210 = tpu.matmul %208, %209, %cst_82 {dimension_numbers = #tpu.dot_dimension_numbers<[1], [0], [0], [1], [0, 0, 1, 1], [], []>} : vector<16x64xbf16>, vector<64x32xbf16>, vector<16x32xf32> -> vector<16x32xf32>
    %c0_83 = arith.constant 0 : index
    %c0_84 = arith.constant 0 : index
    %211 = vector.load %arg8[%c0_83, %c0_84] : memref<1x32xf32, #tpu.memory_space<vmem>>, vector<1x32xf32>
    %212 = vector.broadcast %211 : vector<1x32xf32> to vector<16x32xf32>
    %213 = arith.addf %210, %212 : vector<16x32xf32>
    %214 = math.tanh %213 : vector<16x32xf32>
    %215 = arith.truncf %214 : vector<16x32xf32> to vector<16x32xbf16>
    %216 = vector.shape_cast %192 : vector<16x1xi1> to vector<16x1xi1>
    %217 = vector.broadcast %216 : vector<16x1xi1> to vector<16x32xi1>
    %218 = arith.select %217, %215, %183 : vector<16x32xi1>, vector<16x32xbf16>
    %219 = vector.shape_cast %192 : vector<16x1xi1> to vector<16x1xi1>
    %220 = vector.broadcast %219 : vector<16x1xi1> to vector<16x32xi1>
    %221 = arith.select %220, %215, %9 : vector<16x32xi1>, vector<16x32xbf16>
    %222 = arith.index_cast %c5_i32 : i32 to index
    %c0_85 = arith.constant 0 : index
    %c0_86 = arith.constant 0 : index
    %223 = vector.load %arg9[%222, %c0_85, %c0_86] : memref<8x16x32xbf16, #tpu.memory_space<vmem>>, vector<1x16x32xbf16>
    %224 = vector.shape_cast %223 : vector<1x16x32xbf16> to vector<16x32xbf16>
    %225 = vector.shape_cast %221 : vector<16x32xbf16> to vector<1x16x32xbf16>
    tpu.vector_store %arg9[%222, %c0_85, %c0_86], %225 {strides = array<i32>} : memref<8x16x32xbf16, #tpu.memory_space<vmem>>, vector<1x16x32xbf16>,
    %c6_i32 = arith.constant 6 : i32
    %226 = vector.broadcast %c6_i32 : i32 to vector<16x1xi32>
    %227 = arith.cmpi sgt, %8, %226 : vector<16x1xi32>
    %c16_i32_87 = arith.constant 16 : i32
    %228 = arith.muli %c6_i32, %c16_i32_87 : i32
    %229 = tpu.assume_multiple %228, 16 : i32
    %230 = arith.index_cast %229 : i32 to index
    %c0_88 = arith.constant 0 : index
    %231 = vector.load %arg10[%230, %c0_88] : memref<128x32xf32, #tpu.memory_space<vmem>>, vector<16x32xf32>
    %c0_89 = arith.constant 0 : index
    %c0_90 = arith.constant 0 : index
    %232 = vector.load %arg5[%c0_89, %c0_90] : memref<32x32xbf16, #tpu.memory_space<vmem>>, vector<32x32xbf16>
    %cst_91 = arith.constant dense<0.000000e+00> : vector<16x32xf32>
    %233 = tpu.matmul %204, %232, %cst_91 {dimension_numbers = #tpu.dot_dimension_numbers<[1], [0], [0], [1], [0, 0, 1, 1], [], []>} : vector<16x32xbf16>, vector<32x32xbf16>, vector<16x32xf32> -> vector<16x32xf32>
    %234 = arith.addf %231, %233 : vector<16x32xf32>
    %235 = math.tanh %234 : vector<16x32xf32>
    %236 = arith.truncf %235 : vector<16x32xf32> to vector<16x32xbf16>
    %237 = vector.shape_cast %227 : vector<16x1xi1> to vector<16x1xi1>
    %238 = vector.broadcast %237 : vector<16x1xi1> to vector<16x32xi1>
    %239 = arith.select %238, %236, %204 : vector<16x32xi1>, vector<16x32xbf16>
    %240 = vector.shape_cast %227 : vector<16x1xi1> to vector<16x1xi1>
    %241 = vector.broadcast %240 : vector<16x1xi1> to vector<16x32xi1>
    %242 = arith.select %241, %236, %9 : vector<16x32xi1>, vector<16x32xbf16>
    %243 = tpu.concatenate %242, %218 in 1 : vector<16x32xbf16>, vector<16x32xbf16> -> vector<16x64xbf16>
    %c0_92 = arith.constant 0 : index
    %c0_93 = arith.constant 0 : index
    %244 = vector.load %arg7[%c0_92, %c0_93] : memref<64x32xbf16, #tpu.memory_space<vmem>>, vector<64x32xbf16>
    %cst_94 = arith.constant dense<0.000000e+00> : vector<16x32xf32>
    %245 = tpu.matmul %243, %244, %cst_94 {dimension_numbers = #tpu.dot_dimension_numbers<[1], [0], [0], [1], [0, 0, 1, 1], [], []>} : vector<16x64xbf16>, vector<64x32xbf16>, vector<16x32xf32> -> vector<16x32xf32>
    %c0_95 = arith.constant 0 : index
    %c0_96 = arith.constant 0 : index
    %246 = vector.load %arg8[%c0_95, %c0_96] : memref<1x32xf32, #tpu.memory_space<vmem>>, vector<1x32xf32>
    %247 = vector.broadcast %246 : vector<1x32xf32> to vector<16x32xf32>
    %248 = arith.addf %245, %247 : vector<16x32xf32>
    %249 = math.tanh %248 : vector<16x32xf32>
    %250 = arith.truncf %249 : vector<16x32xf32> to vector<16x32xbf16>
    %251 = vector.shape_cast %227 : vector<16x1xi1> to vector<16x1xi1>
    %252 = vector.broadcast %251 : vector<16x1xi1> to vector<16x32xi1>
    %253 = arith.select %252, %250, %218 : vector<16x32xi1>, vector<16x32xbf16>
    %254 = vector.shape_cast %227 : vector<16x1xi1> to vector<16x1xi1>
    %255 = vector.broadcast %254 : vector<16x1xi1> to vector<16x32xi1>
    %256 = arith.select %255, %250, %9 : vector<16x32xi1>, vector<16x32xbf16>
    %257 = arith.index_cast %c6_i32 : i32 to index
    %c0_97 = arith.constant 0 : index
    %c0_98 = arith.constant 0 : index
    %258 = vector.load %arg9[%257, %c0_97, %c0_98] : memref<8x16x32xbf16, #tpu.memory_space<vmem>>, vector<1x16x32xbf16>
    %259 = vector.shape_cast %258 : vector<1x16x32xbf16> to vector<16x32xbf16>
    %260 = vector.shape_cast %256 : vector<16x32xbf16> to vector<1x16x32xbf16>
    tpu.vector_store %arg9[%257, %c0_97, %c0_98], %260 {strides = array<i32>} : memref<8x16x32xbf16, #tpu.memory_space<vmem>>, vector<1x16x32xbf16>,
    %c7_i32 = arith.constant 7 : i32
    %261 = vector.broadcast %c7_i32 : i32 to vector<16x1xi32>
    %262 = arith.cmpi sgt, %8, %261 : vector<16x1xi32>
    %c16_i32_99 = arith.constant 16 : i32
    %263 = arith.muli %c7_i32, %c16_i32_99 : i32
    %264 = tpu.assume_multiple %263, 16 : i32
    %265 = arith.index_cast %264 : i32 to index
    %c0_100 = arith.constant 0 : index
    %266 = vector.load %arg10[%265, %c0_100] : memref<128x32xf32, #tpu.memory_space<vmem>>, vector<16x32xf32>
    %c0_101 = arith.constant 0 : index
    %c0_102 = arith.constant 0 : index
    %267 = vector.load %arg5[%c0_101, %c0_102] : memref<32x32xbf16, #tpu.memory_space<vmem>>, vector<32x32xbf16>
    %cst_103 = arith.constant dense<0.000000e+00> : vector<16x32xf32>
    %268 = tpu.matmul %239, %267, %cst_103 {dimension_numbers = #tpu.dot_dimension_numbers<[1], [0], [0], [1], [0, 0, 1, 1], [], []>} : vector<16x32xbf16>, vector<32x32xbf16>, vector<16x32xf32> -> vector<16x32xf32>
    %269 = arith.addf %266, %268 : vector<16x32xf32>
    %270 = math.tanh %269 : vector<16x32xf32>
    %271 = arith.truncf %270 : vector<16x32xf32> to vector<16x32xbf16>
    %272 = vector.shape_cast %262 : vector<16x1xi1> to vector<16x1xi1>
    %273 = vector.broadcast %272 : vector<16x1xi1> to vector<16x32xi1>
    %274 = arith.select %273, %271, %239 : vector<16x32xi1>, vector<16x32xbf16>
    %275 = vector.shape_cast %262 : vector<16x1xi1> to vector<16x1xi1>
    %276 = vector.broadcast %275 : vector<16x1xi1> to vector<16x32xi1>
    %277 = arith.select %276, %271, %9 : vector<16x32xi1>, vector<16x32xbf16>
    %278 = tpu.concatenate %277, %253 in 1 : vector<16x32xbf16>, vector<16x32xbf16> -> vector<16x64xbf16>
    %c0_104 = arith.constant 0 : index
    %c0_105 = arith.constant 0 : index
    %279 = vector.load %arg7[%c0_104, %c0_105] : memref<64x32xbf16, #tpu.memory_space<vmem>>, vector<64x32xbf16>
    %cst_106 = arith.constant dense<0.000000e+00> : vector<16x32xf32>
    %280 = tpu.matmul %278, %279, %cst_106 {dimension_numbers = #tpu.dot_dimension_numbers<[1], [0], [0], [1], [0, 0, 1, 1], [], []>} : vector<16x64xbf16>, vector<64x32xbf16>, vector<16x32xf32> -> vector<16x32xf32>
    %c0_107 = arith.constant 0 : index
    %c0_108 = arith.constant 0 : index
    %281 = vector.load %arg8[%c0_107, %c0_108] : memref<1x32xf32, #tpu.memory_space<vmem>>, vector<1x32xf32>
    %282 = vector.broadcast %281 : vector<1x32xf32> to vector<16x32xf32>
    %283 = arith.addf %280, %282 : vector<16x32xf32>
    %284 = math.tanh %283 : vector<16x32xf32>
    %285 = arith.truncf %284 : vector<16x32xf32> to vector<16x32xbf16>
    %286 = vector.shape_cast %262 : vector<16x1xi1> to vector<16x1xi1>
    %287 = vector.broadcast %286 : vector<16x1xi1> to vector<16x32xi1>
    %288 = arith.select %287, %285, %253 : vector<16x32xi1>, vector<16x32xbf16>
    %289 = vector.shape_cast %262 : vector<16x1xi1> to vector<16x1xi1>
    %290 = vector.broadcast %289 : vector<16x1xi1> to vector<16x32xi1>
    %291 = arith.select %290, %285, %9 : vector<16x32xi1>, vector<16x32xbf16>
    %292 = arith.index_cast %c7_i32 : i32 to index
    %c0_109 = arith.constant 0 : index
    %c0_110 = arith.constant 0 : index
    %293 = vector.load %arg9[%292, %c0_109, %c0_110] : memref<8x16x32xbf16, #tpu.memory_space<vmem>>, vector<1x16x32xbf16>
    %294 = vector.shape_cast %293 : vector<1x16x32xbf16> to vector<16x32xbf16>
    %295 = vector.shape_cast %291 : vector<16x32xbf16> to vector<1x16x32xbf16>
    tpu.vector_store %arg9[%292, %c0_109, %c0_110], %295 {strides = array<i32>} : memref<8x16x32xbf16, #tpu.memory_space<vmem>>, vector<1x16x32xbf16>,
    %c8_i32 = arith.constant 8 : i32
    return
  }
  func.func @transform_0(%arg0: i32) -> (i32, i32, i32) {
    %c0_i32 = arith.constant 0 : i32
    %c0_i32_0 = arith.constant 0 : i32
    %c0_i32_1 = arith.constant 0 : i32
    return %c0_i32, %arg0, %c0_i32_0 : i32, i32, i32
  }
  func.func @transform_1(%arg0: i32) -> (i32, i32) {
    %c0_i32 = arith.constant 0 : i32
    %c0_i32_0 = arith.constant 0 : i32
    return %arg0, %c0_i32 : i32, i32
  }
  func.func @transform_2(%arg0: i32) -> (i32, i32, i32) {
    %c0_i32 = arith.constant 0 : i32
    %c0_i32_0 = arith.constant 0 : i32
    %c0_i32_1 = arith.constant 0 : i32
    return %c0_i32, %arg0, %c0_i32_0 : i32, i32, i32
  }
  func.func @transform_3(%arg0: i32) -> (i32, i32) {
    %c0_i32 = arith.constant 0 : i32
    %c0_i32_0 = arith.constant 0 : i32
    %c0_i32_1 = arith.constant 0 : i32
    return %c0_i32, %c0_i32_0 : i32, i32
  }
  func.func @transform_4(%arg0: i32) -> (i32, i32) {
    %c0_i32 = arith.constant 0 : i32
    %c0_i32_0 = arith.constant 0 : i32
    %c0_i32_1 = arith.constant 0 : i32
    return %c0_i32, %c0_i32_0 : i32, i32
  }
  func.func @transform_5(%arg0: i32) -> (i32, i32) {
    %c0_i32 = arith.constant 0 : i32
    %c0_i32_0 = arith.constant 0 : i32
    %c0_i32_1 = arith.constant 0 : i32
    return %c0_i32, %c0_i32_0 : i32, i32
  }
  func.func @transform_6(%arg0: i32) -> (i32, i32) {
    %c0_i32 = arith.constant 0 : i32
    %c0_i32_0 = arith.constant 0 : i32
    %c0_i32_1 = arith.constant 0 : i32
    return %c0_i32, %c0_i32_0 : i32, i32
  }
  func.func @transform_7(%arg0: i32) -> (i32, i32) {
    %c0_i32 = arith.constant 0 : i32
    %c0_i32_0 = arith.constant 0 : i32
    %c0_i32_1 = arith.constant 0 : i32
    return %c0_i32, %c0_i32_0 : i32, i32
  }
  func.func @transform_8(%arg0: i32) -> (i32, i32, i32) {
    %c0_i32 = arith.constant 0 : i32
    %c0_i32_0 = arith.constant 0 : i32
    %c0_i32_1 = arith.constant 0 : i32
    return %c0_i32, %arg0, %c0_i32_0 : i32, i32, i32
  }
}

</mosaic_0001>

<llo_original>
// kernel: tpu_custom_call.1
$region0: #{tpu_custom_call.1}
  #allocation0 [shape = 'u32[]', space=smem, size = 0x4, offset = 0x4, fixed_abs, tag = 'smem constant byte address 0x4 - core index']
  #allocation1 [shape = 'u32[144,128]{1,0:T(1,128)}', space=vmem, size = 0x12000, scoped, tag = 'internal scratch']
  #allocation2 [shape = 'f32[128,32]{1,0:T(8,128)}', space=vmem, size = 0x10000, scoped, tag = 'scratch operand']
  %s0 = inlined_call_operand.vmem [shape: bf16[8,16,16], index: 0, kind: input, shape index: {}]
  %s1 = inlined_call_operand.vmem [shape: s32[16,1], index: 1, kind: input, shape index: {}]
  %s2 = inlined_call_operand.hbm [shape: f32[2,16,32], index: 2, kind: input, shape index: {}]
  %s3 = inlined_call_operand.hbm [shape: bf16[16,32], index: 3, kind: input, shape index: {}]
  %s4 = inlined_call_operand.hbm [shape: bf16[32,32], index: 4, kind: input, shape index: {}]
  %s5 = inlined_call_operand.vmem [shape: f32[1,32], index: 5, kind: input, shape index: {}]
  %s6 = inlined_call_operand.vmem [shape: bf16[64,32], index: 6, kind: input, shape index: {}]
  %s7 = inlined_call_operand.vmem [shape: f32[1,32], index: 7, kind: input, shape index: {}]
  %s8 = inlined_call_operand.hbm [shape: bf16[8,16,32], index: 8, kind: output, shape index: {}]
  %s9 = sld [smem:[#allocation0]]
  $region54: #{tpu_custom_call.1} parent=0
    _
  %s11 = ssub.s32 1, %s9
  %s12 = scalar_select 0, %s11, %s9
  $region1: #{tpu_custom_call.1} parent=0
    #allocation3 [shape = 'u8[16384]{0}', space=vmem, size = 0x4000, scoped, tag = 'input window, operand 2, single buffered']
    #allocation4 [shape = 's32[1]{0}', space=sflag, size = 0x4, scoped, tag = 'scoped memory for tpu_custom_call.1']
    #allocation5 [shape = 's32[1]{0}', space=sflag, size = 0x4, scoped, tag = 'scoped memory for tpu_custom_call.1']
    #allocation6 [shape = 'u8[4096]{0}', space=vmem, size = 0x1000, scoped, tag = 'input window, operand 3, single buffered']
    #allocation7 [shape = 's32[1]{0}', space=sflag, size = 0x4, scoped, tag = 'scoped memory for tpu_custom_call.1']
    #allocation8 [shape = 'u8[8192]{0}', space=vmem, size = 0x2000, scoped, tag = 'input window, operand 4, single buffered']
    #allocation9 [shape = 'u8[32768]{0}', space=vmem, size = 0x8000, scoped, tag = 'output window, operand 0, single buffered']
    %13 = vsyncpa [#allocation4], 0
    %14 = vsyncpa [#allocation7], 0
    %15 = vsyncpa [#allocation5], 0
    // Predicated region
    $region2: #{tpu_custom_call.1} parent=1 // pred_check
      _
    $region3: #{tpu_custom_call.1} parent=1 // pred_check_branch
      %17 = sbr.rel (0) target = $region5
    $region4: #{tpu_custom_call.1} parent=1 // pred_region
      _
    $region5: #{tpu_custom_call.1} parent=1 // pred_fallthru
      _
    // Predicated region
    $region6: #{tpu_custom_call.1} parent=1 // pred_check
      _
    $region7: #{tpu_custom_call.1} parent=1 // pred_check_branch
      %19 = sbr.rel (0) target = $region9
    $region8: #{tpu_custom_call.1} parent=1 // pred_region
      _
    $region9: #{tpu_custom_call.1} parent=1 // pred_fallthru
      _
    // Predicated region
    $region10: #{tpu_custom_call.1} parent=1 // pred_check
      _
    $region11: #{tpu_custom_call.1} parent=1 // pred_check_branch
      %21 = sbr.rel (0) target = $region13
    $region12: #{tpu_custom_call.1} parent=1 // pred_region
      %s23 = ssub.s32 512, 512
      %24 = vsyncadd [#allocation4], %s23
      %s25 = sshll.u32 [#allocation3], 4
      %s26 = int_to_ptr.vmem [resolvable:$true] %s25
      %31 = dma.hbm_to_vmem [thread:$0]  %s2, 512, %s26, [#allocation4], 128, 128, 8
    $region13: #{tpu_custom_call.1} parent=1 // pred_fallthru
      _
    // Predicated region
    $region14: #{tpu_custom_call.1} parent=1 // pred_check
      _
    $region15: #{tpu_custom_call.1} parent=1 // pred_check_branch
      %33 = sbr.rel (0) target = $region17
    $region16: #{tpu_custom_call.1} parent=1 // pred_region
      %s35 = ssub.s32 128, 128
      %36 = vsyncadd [#allocation7], %s35
      %s37 = sshll.u32 [#allocation6], 4
      %s38 = int_to_ptr.vmem [resolvable:$true] %s37
      %43 = dma.hbm_to_vmem [thread:$0]  %s3, 128, %s38, [#allocation7], 64, 64, 4
    $region17: #{tpu_custom_call.1} parent=1 // pred_fallthru
      _
    // Predicated region
    $region18: #{tpu_custom_call.1} parent=1 // pred_check
      _
    $region19: #{tpu_custom_call.1} parent=1 // pred_check_branch
      %45 = sbr.rel (0) target = $region21
    $region20: #{tpu_custom_call.1} parent=1 // pred_region
      %s47 = ssub.s32 256, 256
      %48 = vsyncadd [#allocation7], %s47
      %s49 = sshll.u32 [#allocation8], 4
      %s50 = int_to_ptr.vmem [resolvable:$true] %s49
      %55 = dma.hbm_to_vmem [thread:$0]  %s4, 256, %s50, [#allocation7], 64, 64, 4
    $region21: #{tpu_custom_call.1} parent=1 // pred_fallthru
      _
    // Predicated region
    $region22: #{tpu_custom_call.1} parent=1 // pred_check
      _
    $region23: #{tpu_custom_call.1} parent=1 // pred_check_branch
      %57 = sbr.rel (0) target = $region25
    $region24: #{tpu_custom_call.1} parent=1 // pred_region
      _
    $region25: #{tpu_custom_call.1} parent=1 // pred_fallthru
      _
    // Predicated region
    $region26: #{tpu_custom_call.1} parent=1 // pred_check
      _
    $region27: #{tpu_custom_call.1} parent=1 // pred_check_branch
      %59 = sbr.rel (0) target = $region29
    $region28: #{tpu_custom_call.1} parent=1 // pred_region
      _
    $region29: #{tpu_custom_call.1} parent=1 // pred_fallthru
      _
    // Predicated region
    $region30: #{tpu_custom_call.1} parent=1 // pred_check
      _
    $region31: #{tpu_custom_call.1} parent=1 // pred_check_branch
      %61 = sbr.rel (0) target = $region33
    $region32: #{tpu_custom_call.1} parent=1 // pred_region
      _
    $region33: #{tpu_custom_call.1} parent=1 // pred_fallthru
      _
    // Predicated region
    $region34: #{tpu_custom_call.1} parent=1 // pred_check
      _
    $region35: #{tpu_custom_call.1} parent=1 // pred_check_branch
      %63 = sbr.rel (0) target = $region37
    $region36: #{tpu_custom_call.1} parent=1 // pred_region
      %64 = dma.done [#allocation4], 512
    $region37: #{tpu_custom_call.1} parent=1 // pred_fallthru
      _
    // Predicated region
    $region38: #{tpu_custom_call.1} parent=1 // pred_check
      _
    $region39: #{tpu_custom_call.1} parent=1 // pred_check_branch
      %66 = sbr.rel (0) target = $region41
    $region40: #{tpu_custom_call.1} parent=1 // pred_region
      %67 = dma.done [#allocation7], 128
    $region41: #{tpu_custom_call.1} parent=1 // pred_fallthru
      _
    // Predicated region
    $region42: #{tpu_custom_call.1} parent=1 // pred_check
      _
    $region43: #{tpu_custom_call.1} parent=1 // pred_check_branch
      %69 = sbr.rel (0) target = $region45
    $region44: #{tpu_custom_call.1} parent=1 // pred_region
      %70 = dma.done [#allocation7], 256
    $region45: #{tpu_custom_call.1} parent=1 // pred_fallthru
      _
    %v74 = vld [vmem:[%s0] sm:$0xf]
    %v75 = vld [vmem:[%s0 + $0x4] sm:$0xf]
    %v76 = vld [vmem:[%s0 + $0x8] sm:$0xf]
    %v77 = vld [vmem:[%s0 + $0xc] sm:$0xf]
    %v78 = vld [vmem:[%s0 + $0x10] sm:$0xf]
    %v79 = vld [vmem:[%s0 + $0x14] sm:$0xf]
    %v80 = vld [vmem:[%s0 + $0x18] sm:$0xf]
    %v81 = vld [vmem:[%s0 + $0x1c] sm:$0xf]
    %v82 = vld [vmem:[%s0 + $0x20] sm:$0xf]
    %v83 = vld [vmem:[%s0 + $0x24] sm:$0xf]
    %v84 = vld [vmem:[%s0 + $0x28] sm:$0xf]
    %v85 = vld [vmem:[%s0 + $0x2c] sm:$0xf]
    %v86 = vld [vmem:[%s0 + $0x30] sm:$0xf]
    %v87 = vld [vmem:[%s0 + $0x34] sm:$0xf]
    %v88 = vld [vmem:[%s0 + $0x38] sm:$0xf]
    %v89 = vld [vmem:[%s0 + $0x3c] sm:$0xf]
    %v90 = vld [vmem:[#allocation6] sm:$0xf]
    %v91 = vld [vmem:[#allocation6 + $0x4] sm:$0xf]
    %v92 = vld [vmem:[%s5] sm:$0x1]
    %v94 = vlaneseq
    %v95 = vshrl.u32 %v94, 7
    %v96 = vsub.s32 0, %v95
    %v97 = vrot.slane %v92, %v96
    %v115 = vunpack.c.l.b16 %v74
    %v116 = vunpack.c.l.b16 %v75
    %v117 = vunpack.c.l.b16 %v76
    %v118 = vunpack.c.l.b16 %v77
    %v119 = vunpack.c.l.b16 %v78
    %v120 = vunpack.c.l.b16 %v79
    %v121 = vunpack.c.l.b16 %v80
    %v122 = vunpack.c.l.b16 %v81
    %v123 = vunpack.c.l.b16 %v82
    %v124 = vunpack.c.l.b16 %v83
    %v125 = vunpack.c.l.b16 %v84
    %v126 = vunpack.c.l.b16 %v85
    %v127 = vunpack.c.l.b16 %v86
    %v128 = vunpack.c.l.b16 %v87
    %v129 = vunpack.c.l.b16 %v88
    %v130 = vunpack.c.l.b16 %v89
    %v131 = vpack.c.b16 %v116, %v115
    %v132 = vpack.c.b16 %v118, %v117
    %v133 = vpack.c.b16 %v120, %v119
    %v134 = vpack.c.b16 %v122, %v121
    %v135 = vpack.c.b16 %v124, %v123
    %v136 = vpack.c.b16 %v126, %v125
    %v137 = vpack.c.b16 %v128, %v127
    %v138 = vpack.c.b16 %v130, %v129
    %v141 = vunpack.c.l.b16 %v90
    %v142 = vunpack.c.l.b16 %v91
    %v143 = vpack.c.b16 %v142, %v141
    %vm145 = vcmask 130048
    %v147 = vsel %vm145, %v131, 0
    %v150 = vsel %vm145, %v132, 0
    %v153 = vsel %vm145, %v133, 0
    %v156 = vsel %vm145, %v134, 0
    %v159 = vsel %vm145, %v135, 0
    %v162 = vsel %vm145, %v136, 0
    %v165 = vsel %vm145, %v137, 0
    %v168 = vsel %vm145, %v138, 0
    %170 = vmatprep.subr.bf16.mxu0 0
    %171 = vmatpush1.bf16.msra.mxu0 0
    %172 = vmatprep.subr.bf16.mxu0 0
    %173 = vmatpush1.bf16.msra.mxu0 0
    %174 = vmatprep.subr.bf16.mxu0 0
    %175 = vmatpush1.bf16.msra.mxu0 0
    %176 = vmatprep.subr.bf16.mxu0 0
    %177 = vmatpush1.bf16.msra.mxu0 0
    %178 = vmatprep.subr.bf16.mxu0 0
    %179 = vmatpush1.bf16.msra.mxu0 0
    %180 = vmatprep.subr.bf16.mxu0 0
    %181 = vmatpush1.bf16.msra.mxu0 0
    %182 = vmatprep.subr.bf16.mxu0 0
    %183 = vmatpush1.bf16.msra.mxu0 0
    %184 = vmatprep.subr.bf16.mxu0 0
    %185 = vmatpush1.bf16.msra.mxu0 %v143
    %186 = vmatprep.subr.bf16.mxu0 0
    %187 = vmatpush2.bf16.msra.mxu0 0
    %188 = vmatprep.subr.bf16.mxu0 0
    %189 = vmatpush2.bf16.msra.mxu0 0
    %190 = vmatprep.subr.bf16.mxu0 0
    %191 = vmatpush2.bf16.msra.mxu0 0
    %192 = vmatprep.subr.bf16.mxu0 0
    %193 = vmatpush2.bf16.msra.mxu0 0
    %194 = vmatprep.subr.bf16.mxu0 0
    %195 = vmatpush2.bf16.msra.mxu0 0
    %196 = vmatprep.subr.bf16.mxu0 0
    %197 = vmatpush2.bf16.msra.mxu0 0
    %198 = vmatprep.subr.bf16.mxu0 0
    %199 = vmatpush2.bf16.msra.mxu0 0
    %200 = vmatprep.subr.bf16.mxu0 0
    %201 = vmatpush2.bf16.msra.mxu0 0
    %202 = vmatprep.mubr.bf16.mxu0 0
    %203 = vmatmul.mubr.bf16.gmra.mxu0 %v147
    %v204 = vpop.f32.mrf.mxu0
    %v205 = vadd.f32 %v97, %v204
    %v206 = vpop.f32.mrf.mxu0
    %v207 = vpop.f32.mrf.mxu0
    %v208 = vadd.f32 %v97, %v207
    %v209 = vpop.f32.mrf.mxu0
    %210 = vmatprep.mubr.bf16.mxu0 0
    %211 = vmatmul.mubr.bf16.gmra.mxu0 %v150
    %v212 = vpop.f32.mrf.mxu0
    %v213 = vadd.f32 %v97, %v212
    %v214 = vpop.f32.mrf.mxu0
    %v215 = vpop.f32.mrf.mxu0
    %v216 = vadd.f32 %v97, %v215
    %v217 = vpop.f32.mrf.mxu0
    %218 = vmatprep.mubr.bf16.mxu0 0
    %219 = vmatmul.mubr.bf16.gmra.mxu0 %v153
    %v220 = vpop.f32.mrf.mxu0
    %v221 = vadd.f32 %v97, %v220
    %v222 = vpop.f32.mrf.mxu0
    %v223 = vpop.f32.mrf.mxu0
    %v224 = vadd.f32 %v97, %v223
    %v225 = vpop.f32.mrf.mxu0
    %226 = vmatprep.mubr.bf16.mxu0 0
    %227 = vmatmul.mubr.bf16.gmra.mxu0 %v156
    %v228 = vpop.f32.mrf.mxu0
    %v229 = vadd.f32 %v97, %v228
    %v230 = vpop.f32.mrf.mxu0
    %v231 = vpop.f32.mrf.mxu0
    %v232 = vadd.f32 %v97, %v231
    %v233 = vpop.f32.mrf.mxu0
    %234 = vmatprep.mubr.bf16.mxu0 0
    %235 = vmatmul.mubr.bf16.gmra.mxu0 %v159
    %v236 = vpop.f32.mrf.mxu0
    %v237 = vadd.f32 %v97, %v236
    %v238 = vpop.f32.mrf.mxu0
    %v239 = vpop.f32.mrf.mxu0
    %v240 = vadd.f32 %v97, %v239
    %v241 = vpop.f32.mrf.mxu0
    %242 = vmatprep.mubr.bf16.mxu0 0
    %243 = vmatmul.mubr.bf16.gmra.mxu0 %v162
    %v244 = vpop.f32.mrf.mxu0
    %v245 = vadd.f32 %v97, %v244
    %v246 = vpop.f32.mrf.mxu0
    %v247 = vpop.f32.mrf.mxu0
    %v248 = vadd.f32 %v97, %v247
    %v249 = vpop.f32.mrf.mxu0
    %250 = vmatprep.mubr.bf16.mxu0 0
    %251 = vmatmul.mubr.bf16.gmra.mxu0 %v165
    %v252 = vpop.f32.mrf.mxu0
    %v253 = vadd.f32 %v97, %v252
    %v254 = vpop.f32.mrf.mxu0
    %v255 = vpop.f32.mrf.mxu0
    %v256 = vadd.f32 %v97, %v255
    %v257 = vpop.f32.mrf.mxu0
    %258 = vmatprep.mubr.bf16.mxu0 0
    %259 = vmatmul.mubr.bf16.gmra.mxu0 %v168
    %v260 = vpop.f32.mrf.mxu0
    %v261 = vadd.f32 %v97, %v260
    %v262 = vpop.f32.mrf.mxu0
    %v263 = vpop.f32.mrf.mxu0
    %v264 = vadd.f32 %v97, %v263
    %v265 = vpop.f32.mrf.mxu0
    %266 = vdwg.mxu0
    %vm267 = vcmask 261120
    %268 = vst.msk [vmem:[#allocation2] sm:$0xff] %vm267, %v205
    %269 = vst.msk [vmem:[#allocation2 + $0x8] sm:$0xff] %vm267, %v208
    %270 = vst.msk [vmem:[#allocation2 + $0x10] sm:$0xff] %vm267, %v213
    %271 = vst.msk [vmem:[#allocation2 + $0x18] sm:$0xff] %vm267, %v216
    %272 = vst.msk [vmem:[#allocation2 + $0x20] sm:$0xff] %vm267, %v221
    %273 = vst.msk [vmem:[#allocation2 + $0x28] sm:$0xff] %vm267, %v224
    %274 = vst.msk [vmem:[#allocation2 + $0x30] sm:$0xff] %vm267, %v229
    %275 = vst.msk [vmem:[#allocation2 + $0x38] sm:$0xff] %vm267, %v232
    %276 = vst.msk [vmem:[#allocation2 + $0x40] sm:$0xff] %vm267, %v237
    %277 = vst.msk [vmem:[#allocation2 + $0x48] sm:$0xff] %vm267, %v240
    %278 = vst.msk [vmem:[#allocation2 + $0x50] sm:$0xff] %vm267, %v245
    %279 = vst.msk [vmem:[#allocation2 + $0x58] sm:$0xff] %vm267, %v248
    %280 = vst.msk [vmem:[#allocation2 + $0x60] sm:$0xff] %vm267, %v253
    %281 = vst.msk [vmem:[#allocation2 + $0x68] sm:$0xff] %vm267, %v256
    %282 = vst.msk [vmem:[#allocation2 + $0x70] sm:$0xff] %vm267, %v261
    %283 = vst.msk [vmem:[#allocation2 + $0x78] sm:$0xff] %vm267, %v264
    %v284 = vld [vmem:[%s1] sm:$0xff]
    %v285 = vld [vmem:[%s1 + $0x8] sm:$0xff]
    %v286 = vld [vmem:[#allocation3] sm:$0xff]
    %v287 = vld [vmem:[#allocation3 + $0x8] sm:$0xff]
    %v288 = vpack.c.bf16 %v287, %v286
    %s289 = scalar_lea.vmem [#allocation3], 16
    %v290 = vld [vmem:[%s289] sm:$0xff]
    %v291 = vld [vmem:[%s289 + $0x8] sm:$0xff]
    %v292 = vpack.c.bf16 %v291, %v290
    %vm293 = vcmp.gt.s32.totalorder %v284, 0
    %vm294 = vcmp.gt.s32.totalorder %v285, 0
    %v295 = vld [vmem:[#allocation2] sm:$0xff]
    %v296 = vld [vmem:[#allocation2 + $0x8] sm:$0xff]
    %v297 = vld [vmem:[#allocation8] sm:$0xf]
    %v298 = vld [vmem:[#allocation8 + $0x4] sm:$0xf]
    %v299 = vld [vmem:[#allocation8 + $0x8] sm:$0xf]
    %v300 = vld [vmem:[#allocation8 + $0xc] sm:$0xf]
    %v305 = vunpack.c.l.b16 %v297
    %v306 = vunpack.c.l.b16 %v298
    %v307 = vunpack.c.l.b16 %v299
    %v308 = vunpack.c.l.b16 %v300
    %v309 = vpack.c.b16 %v306, %v305
    %v310 = vpack.c.b16 %v308, %v307
    %v314 = vsel %vm267, %v288, 0
    %316 = vmatprep.subr.bf16.mxu0 0
    %317 = vmatpush1.bf16.msra.mxu0 0
    %318 = vmatprep.subr.bf16.mxu0 0
    %319 = vmatpush1.bf16.msra.mxu0 0
    %320 = vmatprep.subr.bf16.mxu0 0
    %321 = vmatpush1.bf16.msra.mxu0 0
    %322 = vmatprep.subr.bf16.mxu0 0
    %323 = vmatpush1.bf16.msra.mxu0 0
    %324 = vmatprep.subr.bf16.mxu0 0
    %325 = vmatpush1.bf16.msra.mxu0 0
    %326 = vmatprep.subr.bf16.mxu0 0
    %327 = vmatpush1.bf16.msra.mxu0 0
    %328 = vmatprep.subr.bf16.mxu0 0
    %329 = vmatpush1.bf16.msra.mxu0 %v310
    %330 = vmatprep.subr.bf16.mxu0 0
    %331 = vmatpush1.bf16.msra.mxu0 %v309
    %332 = vmatprep.subr.bf16.mxu0 0
    %333 = vmatpush2.bf16.msra.mxu0 0
    %334 = vmatprep.subr.bf16.mxu0 0
    %335 = vmatpush2.bf16.msra.mxu0 0
    %336 = vmatprep.subr.bf16.mxu0 0
    %337 = vmatpush2.bf16.msra.mxu0 0
    %338 = vmatprep.subr.bf16.mxu0 0
    %339 = vmatpush2.bf16.msra.mxu0 0
    %340 = vmatprep.subr.bf16.mxu0 0
    %341 = vmatpush2.bf16.msra.mxu0 0
    %342 = vmatprep.subr.bf16.mxu0 0
    %343 = vmatpush2.bf16.msra.mxu0 0
    %344 = vmatprep.subr.bf16.mxu0 0
    %345 = vmatpush2.bf16.msra.mxu0 0
    %346 = vmatprep.subr.bf16.mxu0 0
    %347 = vmatpush2.bf16.msra.mxu0 0
    %348 = vmatprep.mubr.bf16.mxu0 0
    %349 = vmatmul.mubr.bf16.gmra.mxu0 %v314
    %v350 = vpop.f32.mrf.mxu0
    %v351 = vadd.f32 0.0, %v350
    %v352 = vpop.f32.mrf.mxu0
    %v353 = vpop.f32.mrf.mxu0
    %v354 = vadd.f32 0.0, %v353
    %v355 = vpop.f32.mrf.mxu0
    %356 = vdwg.mxu0
    %v357 = vadd.f32 %v295, %v351
    %v358 = vadd.f32 %v296, %v354
    %v359 = vtanh.pop %v357
    %v360 = vtanh.pop %v358
    %v361 = vpack.c.bf16 %v360, %v359
    %v362 = vsel %vm293, 1, 0
    %v363 = vsel %vm294, 1, 0
    %364 = vset.pattern.permute.xlu0 0
    %365 = vperm.xlu0 %364, %v362
    %v366 = vpop.permute.xlu0 %365
    %367 = vset.pattern.permute.xlu0 0
    %368 = vperm.xlu0 %367, %v363
    %v369 = vpop.permute.xlu0 %368
    %vm370 = vcmp.eq.s32.totalorder %v366, 1
    %vm371 = vcmp.eq.s32.totalorder %v369, 1
    %vm372 = vmpackc.low %vm370, %vm370
    %vm373 = vmpackc.low %vm371, %vm371
    %v374 = vsel %vm372, 65537, 0
    %v375 = vsel %vm373, 65537, 0
    %v376 = vunpack.c.l.b16 %v374
    %v377 = vunpack.c.l.b16 %v375
    %v378 = vpack.c.b16 %v377, %v376
    %vm379 = vcmp.ne.s16.totalorder %v378, 0
    %v380 = vsel %vm379, %v361, %v288
    %v381 = vsel %vm379, %v361, 0
    %383 = vrot.lane.b32.xlu0 %v292, 32
    %v384 = vpop.permute.xlu0 %383
    %v387 = vsel %vm267, %v381, %v384
    %v388 = vld [vmem:[%s6] sm:$0xf]
    %v389 = vld [vmem:[%s6 + $0x4] sm:$0xf]
    %v390 = vld [vmem:[%s6 + $0x8] sm:$0xf]
    %v391 = vld [vmem:[%s6 + $0xc] sm:$0xf]
    %v392 = vld [vmem:[%s6 + $0x10] sm:$0xf]
    %v393 = vld [vmem:[%s6 + $0x14] sm:$0xf]
    %v394 = vld [vmem:[%s6 + $0x18] sm:$0xf]
    %v395 = vld [vmem:[%s6 + $0x1c] sm:$0xf]
    %v396 = vld [vmem:[%s7] sm:$0x1]
    %v398 = vlaneseq
    %v399 = vshrl.u32 %v398, 7
    %v400 = vsub.s32 0, %v399
    %v401 = vrot.slane %v396, %v400
    %v411 = vunpack.c.l.b16 %v388
    %v412 = vunpack.c.l.b16 %v389
    %v413 = vunpack.c.l.b16 %v390
    %v414 = vunpack.c.l.b16 %v391
    %v415 = vunpack.c.l.b16 %v392
    %v416 = vunpack.c.l.b16 %v393
    %v417 = vunpack.c.l.b16 %v394
    %v418 = vunpack.c.l.b16 %v395
    %v419 = vpack.c.b16 %v412, %v411
    %v420 = vpack.c.b16 %v414, %v413
    %v421 = vpack.c.b16 %v416, %v415
    %v422 = vpack.c.b16 %v418, %v417
    %vm427 = vcmask 523264
    %v428 = vsel %vm427, %v387, 0
    %430 = vmatprep.subr.bf16.mxu0 0
    %431 = vmatpush1.bf16.msra.mxu0 0
    %432 = vmatprep.subr.bf16.mxu0 0
    %433 = vmatpush1.bf16.msra.mxu0 0
    %434 = vmatprep.subr.bf16.mxu0 0
    %435 = vmatpush1.bf16.msra.mxu0 0
    %436 = vmatprep.subr.bf16.mxu0 0
    %437 = vmatpush1.bf16.msra.mxu0 0
    %438 = vmatprep.subr.bf16.mxu0 0
    %439 = vmatpush1.bf16.msra.mxu0 %v422
    %440 = vmatprep.subr.bf16.mxu0 0
    %441 = vmatpush1.bf16.msra.mxu0 %v421
    %442 = vmatprep.subr.bf16.mxu0 0
    %443 = vmatpush1.bf16.msra.mxu0 %v420
    %444 = vmatprep.subr.bf16.mxu0 0
    %445 = vmatpush1.bf16.msra.mxu0 %v419
    %446 = vmatprep.subr.bf16.mxu0 0
    %447 = vmatpush2.bf16.msra.mxu0 0
    %448 = vmatprep.subr.bf16.mxu0 0
    %449 = vmatpush2.bf16.msra.mxu0 0
    %450 = vmatprep.subr.bf16.mxu0 0
    %451 = vmatpush2.bf16.msra.mxu0 0
    %452 = vmatprep.subr.bf16.mxu0 0
    %453 = vmatpush2.bf16.msra.mxu0 0
    %454 = vmatprep.subr.bf16.mxu0 0
    %455 = vmatpush2.bf16.msra.mxu0 0
    %456 = vmatprep.subr.bf16.mxu0 0
    %457 = vmatpush2.bf16.msra.mxu0 0
    %458 = vmatprep.subr.bf16.mxu0 0
    %459 = vmatpush2.bf16.msra.mxu0 0
    %460 = vmatprep.subr.bf16.mxu0 0
    %461 = vmatpush2.bf16.msra.mxu0 0
    %462 = vmatprep.mubr.bf16.mxu0 0
    %463 = vmatmul.mubr.bf16.gmra.mxu0 %v428
    %v464 = vpop.f32.mrf.mxu0
    %v465 = vadd.f32 %v401, %v464
    %v466 = vpop.f32.mrf.mxu0
    %v467 = vpop.f32.mrf.mxu0
    %v468 = vadd.f32 %v401, %v467
    %v469 = vpop.f32.mrf.mxu0
    %470 = vdwg.mxu0
    %v471 = vtanh.pop %v465
    %v472 = vtanh.pop %v468
    %v473 = vpack.c.bf16 %v472, %v471
    %v474 = vsel %vm379, %v473, %v292
    %v475 = vsel %vm379, %v473, 0
    %v477 = vunpack.c.l.b16 %v475
    %v478 = vunpack.c.h.b16 %v475
    %v479 = vpack.c.b16 %v477, %v477
    %v480 = vpack.c.b16 %v478, %v478
    %vm483 = vcmask 257024
    %484 = vst.msk [vmem:[#allocation9] sm:$0xf] %vm483, %v479
    %485 = vst.msk [vmem:[#allocation9 + $0x4] sm:$0xf] %vm483, %v480
    %vm486 = vcmp.gt.s32.totalorder %v284, 1
    %vm487 = vcmp.gt.s32.totalorder %v285, 1
    %s488 = scalar_lea.vmem [#allocation2], 16
    %v489 = vld [vmem:[%s488] sm:$0xff]
    %v490 = vld [vmem:[%s488 + $0x8] sm:$0xff]
    %v491 = vld [vmem:[#allocation8] sm:$0xf]
    %v492 = vld [vmem:[#allocation8 + $0x4] sm:$0xf]
    %v493 = vld [vmem:[#allocation8 + $0x8] sm:$0xf]
    %v494 = vld [vmem:[#allocation8 + $0xc] sm:$0xf]
    %v499 = vunpack.c.l.b16 %v491
    %v500 = vunpack.c.l.b16 %v492
    %v501 = vunpack.c.l.b16 %v493
    %v502 = vunpack.c.l.b16 %v494
    %v503 = vpack.c.b16 %v500, %v499
    %v504 = vpack.c.b16 %v502, %v501
    %v508 = vsel %vm267, %v380, 0
    %510 = vmatprep.subr.bf16.mxu0 0
    %511 = vmatpush1.bf16.msra.mxu0 0
    %512 = vmatprep.subr.bf16.mxu0 0
    %513 = vmatpush1.bf16.msra.mxu0 0
    %514 = vmatprep.subr.bf16.mxu0 0
    %515 = vmatpush1.bf16.msra.mxu0 0
    %516 = vmatprep.subr.bf16.mxu0 0
    %517 = vmatpush1.bf16.msra.mxu0 0
    %518 = vmatprep.subr.bf16.mxu0 0
    %519 = vmatpush1.bf16.msra.mxu0 0
    %520 = vmatprep.subr.bf16.mxu0 0
    %521 = vmatpush1.bf16.msra.mxu0 0
    %522 = vmatprep.subr.bf16.mxu0 0
    %523 = vmatpush1.bf16.msra.mxu0 %v504
    %524 = vmatprep.subr.bf16.mxu0 0
    %525 = vmatpush1.bf16.msra.mxu0 %v503
    %526 = vmatprep.subr.bf16.mxu0 0
    %527 = vmatpush2.bf16.msra.mxu0 0
    %528 = vmatprep.subr.bf16.mxu0 0
    %529 = vmatpush2.bf16.msra.mxu0 0
    %530 = vmatprep.subr.bf16.mxu0 0
    %531 = vmatpush2.bf16.msra.mxu0 0
    %532 = vmatprep.subr.bf16.mxu0 0
    %533 = vmatpush2.bf16.msra.mxu0 0
    %534 = vmatprep.subr.bf16.mxu0 0
    %535 = vmatpush2.bf16.msra.mxu0 0
    %536 = vmatprep.subr.bf16.mxu0 0
    %537 = vmatpush2.bf16.msra.mxu0 0
    %538 = vmatprep.subr.bf16.mxu0 0
    %539 = vmatpush2.bf16.msra.mxu0 0
    %540 = vmatprep.subr.bf16.mxu0 0
    %541 = vmatpush2.bf16.msra.mxu0 0
    %542 = vmatprep.mubr.bf16.mxu0 0
    %543 = vmatmul.mubr.bf16.gmra.mxu0 %v508
    %v544 = vpop.f32.mrf.mxu0
    %v545 = vadd.f32 0.0, %v544
    %v546 = vpop.f32.mrf.mxu0
    %v547 = vpop.f32.mrf.mxu0
    %v548 = vadd.f32 0.0, %v547
    %v549 = vpop.f32.mrf.mxu0
    %550 = vdwg.mxu0
    %v551 = vadd.f32 %v489, %v545
    %v552 = vadd.f32 %v490, %v548
    %v553 = vtanh.pop %v551
    %v554 = vtanh.pop %v552
    %v555 = vpack.c.bf16 %v554, %v553
    %v556 = vsel %vm486, 1, 0
    %v557 = vsel %vm487, 1, 0
    %558 = vset.pattern.permute.xlu0 0
    %559 = vperm.xlu0 %558, %v556
    %v560 = vpop.permute.xlu0 %559
    %561 = vset.pattern.permute.xlu0 0
    %562 = vperm.xlu0 %561, %v557
    %v563 = vpop.permute.xlu0 %562
    %vm564 = vcmp.eq.s32.totalorder %v560, 1
    %vm565 = vcmp.eq.s32.totalorder %v563, 1
    %vm566 = vmpackc.low %vm564, %vm564
    %vm567 = vmpackc.low %vm565, %vm565
    %v568 = vsel %vm566, 65537, 0
    %v569 = vsel %vm567, 65537, 0
    %v570 = vunpack.c.l.b16 %v568
    %v571 = vunpack.c.l.b16 %v569
    %v572 = vpack.c.b16 %v571, %v570
    %vm573 = vcmp.ne.s16.totalorder %v572, 0
    %v574 = vsel %vm573, %v555, %v380
    %v575 = vsel %vm573, %v555, 0
    %577 = vrot.lane.b32.xlu0 %v474, 32
    %v578 = vpop.permute.xlu0 %577
    %v581 = vsel %vm267, %v575, %v578
    %v582 = vld [vmem:[%s6] sm:$0xf]
    %v583 = vld [vmem:[%s6 + $0x4] sm:$0xf]
    %v584 = vld [vmem:[%s6 + $0x8] sm:$0xf]
    %v585 = vld [vmem:[%s6 + $0xc] sm:$0xf]
    %v586 = vld [vmem:[%s6 + $0x10] sm:$0xf]
    %v587 = vld [vmem:[%s6 + $0x14] sm:$0xf]
    %v588 = vld [vmem:[%s6 + $0x18] sm:$0xf]
    %v589 = vld [vmem:[%s6 + $0x1c] sm:$0xf]
    %v590 = vld [vmem:[%s7] sm:$0x1]
    %v592 = vlaneseq
    %v593 = vshrl.u32 %v592, 7
    %v594 = vsub.s32 0, %v593
    %v595 = vrot.slane %v590, %v594
    %v605 = vunpack.c.l.b16 %v582
    %v606 = vunpack.c.l.b16 %v583
    %v607 = vunpack.c.l.b16 %v584
    %v608 = vunpack.c.l.b16 %v585
    %v609 = vunpack.c.l.b16 %v586
    %v610 = vunpack.c.l.b16 %v587
    %v611 = vunpack.c.l.b16 %v588
    %v612 = vunpack.c.l.b16 %v589
    %v613 = vpack.c.b16 %v606, %v605
    %v614 = vpack.c.b16 %v608, %v607
    %v615 = vpack.c.b16 %v610, %v609
    %v616 = vpack.c.b16 %v612, %v611
    %v621 = vsel %vm427, %v581, 0
    %623 = vmatprep.subr.bf16.mxu0 0
    %624 = vmatpush1.bf16.msra.mxu0 0
    %625 = vmatprep.subr.bf16.mxu0 0
    %626 = vmatpush1.bf16.msra.mxu0 0
    %627 = vmatprep.subr.bf16.mxu0 0
    %628 = vmatpush1.bf16.msra.mxu0 0
    %629 = vmatprep.subr.bf16.mxu0 0
    %630 = vmatpush1.bf16.msra.mxu0 0
    %631 = vmatprep.subr.bf16.mxu0 0
    %632 = vmatpush1.bf16.msra.mxu0 %v616
    %633 = vmatprep.subr.bf16.mxu0 0
    %634 = vmatpush1.bf16.msra.mxu0 %v615
    %635 = vmatprep.subr.bf16.mxu0 0
    %636 = vmatpush1.bf16.msra.mxu0 %v614
    %637 = vmatprep.subr.bf16.mxu0 0
    %638 = vmatpush1.bf16.msra.mxu0 %v613
    %639 = vmatprep.subr.bf16.mxu0 0
    %640 = vmatpush2.bf16.msra.mxu0 0
    %641 = vmatprep.subr.bf16.mxu0 0
    %642 = vmatpush2.bf16.msra.mxu0 0
    %643 = vmatprep.subr.bf16.mxu0 0
    %644 = vmatpush2.bf16.msra.mxu0 0
    %645 = vmatprep.subr.bf16.mxu0 0
    %646 = vmatpush2.bf16.msra.mxu0 0
    %647 = vmatprep.subr.bf16.mxu0 0
    %648 = vmatpush2.bf16.msra.mxu0 0
    %649 = vmatprep.subr.bf16.mxu0 0
    %650 = vmatpush2.bf16.msra.mxu0 0
    %651 = vmatprep.subr.bf16.mxu0 0
    %652 = vmatpush2.bf16.msra.mxu0 0
    %653 = vmatprep.subr.bf16.mxu0 0
    %654 = vmatpush2.bf16.msra.mxu0 0
    %655 = vmatprep.mubr.bf16.mxu0 0
    %656 = vmatmul.mubr.bf16.gmra.mxu0 %v621
    %v657 = vpop.f32.mrf.mxu0
    %v658 = vadd.f32 %v595, %v657
    %v659 = vpop.f32.mrf.mxu0
    %v660 = vpop.f32.mrf.mxu0
    %v661 = vadd.f32 %v595, %v660
    %v662 = vpop.f32.mrf.mxu0
    %663 = vdwg.mxu0
    %v664 = vtanh.pop %v658
    %v665 = vtanh.pop %v661
    %v666 = vpack.c.bf16 %v665, %v664
    %v667 = vsel %vm573, %v666, %v474
    %v668 = vsel %vm573, %v666, 0
    %v670 = vunpack.c.l.b16 %v668
    %v671 = vunpack.c.h.b16 %v668
    %v672 = vpack.c.b16 %v670, %v670
    %v673 = vpack.c.b16 %v671, %v671
    %s676 = scalar_lea.vmem [#allocation9], 8
    %677 = vst.msk [vmem:[%s676] sm:$0xf] %vm483, %v672
    %678 = vst.msk [vmem:[%s676 + $0x4] sm:$0xf] %vm483, %v673
    %vm679 = vcmp.gt.s32.totalorder %v284, 2
    %vm680 = vcmp.gt.s32.totalorder %v285, 2
    %s681 = scalar_lea.vmem [#allocation2], 32
    %v682 = vld [vmem:[%s681] sm:$0xff]
    %v683 = vld [vmem:[%s681 + $0x8] sm:$0xff]
    %v684 = vld [vmem:[#allocation8] sm:$0xf]
    %v685 = vld [vmem:[#allocation8 + $0x4] sm:$0xf]
    %v686 = vld [vmem:[#allocation8 + $0x8] sm:$0xf]
    %v687 = vld [vmem:[#allocation8 + $0xc] sm:$0xf]
    %v692 = vunpack.c.l.b16 %v684
    %v693 = vunpack.c.l.b16 %v685
    %v694 = vunpack.c.l.b16 %v686
    %v695 = vunpack.c.l.b16 %v687
    %v696 = vpack.c.b16 %v693, %v692
    %v697 = vpack.c.b16 %v695, %v694
    %v701 = vsel %vm267, %v574, 0
    %703 = vmatprep.subr.bf16.mxu0 0
    %704 = vmatpush1.bf16.msra.mxu0 0
    %705 = vmatprep.subr.bf16.mxu0 0
    %706 = vmatpush1.bf16.msra.mxu0 0
    %707 = vmatprep.subr.bf16.mxu0 0
    %708 = vmatpush1.bf16.msra.mxu0 0
    %709 = vmatprep.subr.bf16.mxu0 0
    %710 = vmatpush1.bf16.msra.mxu0 0
    %711 = vmatprep.subr.bf16.mxu0 0
    %712 = vmatpush1.bf16.msra.mxu0 0
    %713 = vmatprep.subr.bf16.mxu0 0
    %714 = vmatpush1.bf16.msra.mxu0 0
    %715 = vmatprep.subr.bf16.mxu0 0
    %716 = vmatpush1.bf16.msra.mxu0 %v697
    %717 = vmatprep.subr.bf16.mxu0 0
    %718 = vmatpush1.bf16.msra.mxu0 %v696
    %719 = vmatprep.subr.bf16.mxu0 0
    %720 = vmatpush2.bf16.msra.mxu0 0
    %721 = vmatprep.subr.bf16.mxu0 0
    %722 = vmatpush2.bf16.msra.mxu0 0
    %723 = vmatprep.subr.bf16.mxu0 0
    %724 = vmatpush2.bf16.msra.mxu0 0
    %725 = vmatprep.subr.bf16.mxu0 0
    %726 = vmatpush2.bf16.msra.mxu0 0
    %727 = vmatprep.subr.bf16.mxu0 0
    %728 = vmatpush2.bf16.msra.mxu0 0
    %729 = vmatprep.subr.bf16.mxu0 0
    %730 = vmatpush2.bf16.msra.mxu0 0
    %731 = vmatprep.subr.bf16.mxu0 0
    %732 = vmatpush2.bf16.msra.mxu0 0
    %733 = vmatprep.subr.bf16.mxu0 0
    %734 = vmatpush2.bf16.msra.mxu0 0
    %735 = vmatprep.mubr.bf16.mxu0 0
    %736 = vmatmul.mubr.bf16.gmra.mxu0 %v701
    %v737 = vpop.f32.mrf.mxu0
    %v738 = vadd.f32 0.0, %v737
    %v739 = vpop.f32.mrf.mxu0
    %v740 = vpop.f32.mrf.mxu0
    %v741 = vadd.f32 0.0, %v740
    %v742 = vpop.f32.mrf.mxu0
    %743 = vdwg.mxu0
    %v744 = vadd.f32 %v682, %v738
    %v745 = vadd.f32 %v683, %v741
    %v746 = vtanh.pop %v744
    %v747 = vtanh.pop %v745
    %v748 = vpack.c.bf16 %v747, %v746
    %v749 = vsel %vm679, 1, 0
    %v750 = vsel %vm680, 1, 0
    %751 = vset.pattern.permute.xlu0 0
    %752 = vperm.xlu0 %751, %v749
    %v753 = vpop.permute.xlu0 %752
    %754 = vset.pattern.permute.xlu0 0
    %755 = vperm.xlu0 %754, %v750
    %v756 = vpop.permute.xlu0 %755
    %vm757 = vcmp.eq.s32.totalorder %v753, 1
    %vm758 = vcmp.eq.s32.totalorder %v756, 1
    %vm759 = vmpackc.low %vm757, %vm757
    %vm760 = vmpackc.low %vm758, %vm758
    %v761 = vsel %vm759, 65537, 0
    %v762 = vsel %vm760, 65537, 0
    %v763 = vunpack.c.l.b16 %v761
    %v764 = vunpack.c.l.b16 %v762
    %v765 = vpack.c.b16 %v764, %v763
    %vm766 = vcmp.ne.s16.totalorder %v765, 0
    %v767 = vsel %vm766, %v748, %v574
    %v768 = vsel %vm766, %v748, 0
    %770 = vrot.lane.b32.xlu0 %v667, 32
    %v771 = vpop.permute.xlu0 %770
    %v774 = vsel %vm267, %v768, %v771
    %v775 = vld [vmem:[%s6] sm:$0xf]
    %v776 = vld [vmem:[%s6 + $0x4] sm:$0xf]
    %v777 = vld [vmem:[%s6 + $0x8] sm:$0xf]
    %v778 = vld [vmem:[%s6 + $0xc] sm:$0xf]
    %v779 = vld [vmem:[%s6 + $0x10] sm:$0xf]
    %v780 = vld [vmem:[%s6 + $0x14] sm:$0xf]
    %v781 = vld [vmem:[%s6 + $0x18] sm:$0xf]
    %v782 = vld [vmem:[%s6 + $0x1c] sm:$0xf]
    %v783 = vld [vmem:[%s7] sm:$0x1]
    %v785 = vlaneseq
    %v786 = vshrl.u32 %v785, 7
    %v787 = vsub.s32 0, %v786
    %v788 = vrot.slane %v783, %v787
    %v798 = vunpack.c.l.b16 %v775
    %v799 = vunpack.c.l.b16 %v776
    %v800 = vunpack.c.l.b16 %v777
    %v801 = vunpack.c.l.b16 %v778
    %v802 = vunpack.c.l.b16 %v779
    %v803 = vunpack.c.l.b16 %v780
    %v804 = vunpack.c.l.b16 %v781
    %v805 = vunpack.c.l.b16 %v782
    %v806 = vpack.c.b16 %v799, %v798
    %v807 = vpack.c.b16 %v801, %v800
    %v808 = vpack.c.b16 %v803, %v802
    %v809 = vpack.c.b16 %v805, %v804
    %v814 = vsel %vm427, %v774, 0
    %816 = vmatprep.subr.bf16.mxu0 0
    %817 = vmatpush1.bf16.msra.mxu0 0
    %818 = vmatprep.subr.bf16.mxu0 0
    %819 = vmatpush1.bf16.msra.mxu0 0
    %820 = vmatprep.subr.bf16.mxu0 0
    %821 = vmatpush1.bf16.msra.mxu0 0
    %822 = vmatprep.subr.bf16.mxu0 0
    %823 = vmatpush1.bf16.msra.mxu0 0
    %824 = vmatprep.subr.bf16.mxu0 0
    %825 = vmatpush1.bf16.msra.mxu0 %v809
    %826 = vmatprep.subr.bf16.mxu0 0
    %827 = vmatpush1.bf16.msra.mxu0 %v808
    %828 = vmatprep.subr.bf16.mxu0 0
    %829 = vmatpush1.bf16.msra.mxu0 %v807
    %830 = vmatprep.subr.bf16.mxu0 0
    %831 = vmatpush1.bf16.msra.mxu0 %v806
    %832 = vmatprep.subr.bf16.mxu0 0
    %833 = vmatpush2.bf16.msra.mxu0 0
    %834 = vmatprep.subr.bf16.mxu0 0
    %835 = vmatpush2.bf16.msra.mxu0 0
    %836 = vmatprep.subr.bf16.mxu0 0
    %837 = vmatpush2.bf16.msra.mxu0 0
    %838 = vmatprep.subr.bf16.mxu0 0
    %839 = vmatpush2.bf16.msra.mxu0 0
    %840 = vmatprep.subr.bf16.mxu0 0
    %841 = vmatpush2.bf16.msra.mxu0 0
    %842 = vmatprep.subr.bf16.mxu0 0
    %843 = vmatpush2.bf16.msra.mxu0 0
    %844 = vmatprep.subr.bf16.mxu0 0
    %845 = vmatpush2.bf16.msra.mxu0 0
    %846 = vmatprep.subr.bf16.mxu0 0
    %847 = vmatpush2.bf16.msra.mxu0 0
    %848 = vmatprep.mubr.bf16.mxu0 0
    %849 = vmatmul.mubr.bf16.gmra.mxu0 %v814
    %v850 = vpop.f32.mrf.mxu0
    %v851 = vadd.f32 %v788, %v850
    %v852 = vpop.f32.mrf.mxu0
    %v853 = vpop.f32.mrf.mxu0
    %v854 = vadd.f32 %v788, %v853
    %v855 = vpop.f32.mrf.mxu0
    %856 = vdwg.mxu0
    %v857 = vtanh.pop %v851
    %v858 = vtanh.pop %v854
    %v859 = vpack.c.bf16 %v858, %v857
    %v860 = vsel %vm766, %v859, %v667
    %v861 = vsel %vm766, %v859, 0
    %v863 = vunpack.c.l.b16 %v861
    %v864 = vunpack.c.h.b16 %v861
    %v865 = vpack.c.b16 %v863, %v863
    %v866 = vpack.c.b16 %v864, %v864
    %s869 = scalar_lea.vmem [#allocation9], 16
    %870 = vst.msk [vmem:[%s869] sm:$0xf] %vm483, %v865
    %871 = vst.msk [vmem:[%s869 + $0x4] sm:$0xf] %vm483, %v866
    %vm872 = vcmp.gt.s32.totalorder %v284, 3
    %vm873 = vcmp.gt.s32.totalorder %v285, 3
    %s874 = scalar_lea.vmem [#allocation2], 48
    %v875 = vld [vmem:[%s874] sm:$0xff]
    %v876 = vld [vmem:[%s874 + $0x8] sm:$0xff]
    %v877 = vld [vmem:[#allocation8] sm:$0xf]
    %v878 = vld [vmem:[#allocation8 + $0x4] sm:$0xf]
    %v879 = vld [vmem:[#allocation8 + $0x8] sm:$0xf]
    %v880 = vld [vmem:[#allocation8 + $0xc] sm:$0xf]
    %v885 = vunpack.c.l.b16 %v877
    %v886 = vunpack.c.l.b16 %v878
    %v887 = vunpack.c.l.b16 %v879
    %v888 = vunpack.c.l.b16 %v880
    %v889 = vpack.c.b16 %v886, %v885
    %v890 = vpack.c.b16 %v888, %v887
    %v894 = vsel %vm267, %v767, 0
    %896 = vmatprep.subr.bf16.mxu0 0
    %897 = vmatpush1.bf16.msra.mxu0 0
    %898 = vmatprep.subr.bf16.mxu0 0
    %899 = vmatpush1.bf16.msra.mxu0 0
    %900 = vmatprep.subr.bf16.mxu0 0
    %901 = vmatpush1.bf16.msra.mxu0 0
    %902 = vmatprep.subr.bf16.mxu0 0
    %903 = vmatpush1.bf16.msra.mxu0 0
    %904 = vmatprep.subr.bf16.mxu0 0
    %905 = vmatpush1.bf16.msra.mxu0 0
    %906 = vmatprep.subr.bf16.mxu0 0
    %907 = vmatpush1.bf16.msra.mxu0 0
    %908 = vmatprep.subr.bf16.mxu0 0
    %909 = vmatpush1.bf16.msra.mxu0 %v890
    %910 = vmatprep.subr.bf16.mxu0 0
    %911 = vmatpush1.bf16.msra.mxu0 %v889
    %912 = vmatprep.subr.bf16.mxu0 0
    %913 = vmatpush2.bf16.msra.mxu0 0
    %914 = vmatprep.subr.bf16.mxu0 0
    %915 = vmatpush2.bf16.msra.mxu0 0
    %916 = vmatprep.subr.bf16.mxu0 0
    %917 = vmatpush2.bf16.msra.mxu0 0
    %918 = vmatprep.subr.bf16.mxu0 0
    %919 = vmatpush2.bf16.msra.mxu0 0
    %920 = vmatprep.subr.bf16.mxu0 0
    %921 = vmatpush2.bf16.msra.mxu0 0
    %922 = vmatprep.subr.bf16.mxu0 0
    %923 = vmatpush2.bf16.msra.mxu0 0
    %924 = vmatprep.subr.bf16.mxu0 0
    %925 = vmatpush2.bf16.msra.mxu0 0
    %926 = vmatprep.subr.bf16.mxu0 0
    %927 = vmatpush2.bf16.msra.mxu0 0
    %928 = vmatprep.mubr.bf16.mxu0 0
    %929 = vmatmul.mubr.bf16.gmra.mxu0 %v894
    %v930 = vpop.f32.mrf.mxu0
    %v931 = vadd.f32 0.0, %v930
    %v932 = vpop.f32.mrf.mxu0
    %v933 = vpop.f32.mrf.mxu0
    %v934 = vadd.f32 0.0, %v933
    %v935 = vpop.f32.mrf.mxu0
    %936 = vdwg.mxu0
    %v937 = vadd.f32 %v875, %v931
    %v938 = vadd.f32 %v876, %v934
    %v939 = vtanh.pop %v937
    %v940 = vtanh.pop %v938
    %v941 = vpack.c.bf16 %v940, %v939
    %v942 = vsel %vm872, 1, 0
    %v943 = vsel %vm873, 1, 0
    %944 = vset.pattern.permute.xlu0 0
    %945 = vperm.xlu0 %944, %v942
    %v946 = vpop.permute.xlu0 %945
    %947 = vset.pattern.permute.xlu0 0
    %948 = vperm.xlu0 %947, %v943
    %v949 = vpop.permute.xlu0 %948
    %vm950 = vcmp.eq.s32.totalorder %v946, 1
    %vm951 = vcmp.eq.s32.totalorder %v949, 1
    %vm952 = vmpackc.low %vm950, %vm950
    %vm953 = vmpackc.low %vm951, %vm951
    %v954 = vsel %vm952, 65537, 0
    %v955 = vsel %vm953, 65537, 0
    %v956 = vunpack.c.l.b16 %v954
    %v957 = vunpack.c.l.b16 %v955
    %v958 = vpack.c.b16 %v957, %v956
    %vm959 = vcmp.ne.s16.totalorder %v958, 0
    %v960 = vsel %vm959, %v941, %v767
    %v961 = vsel %vm959, %v941, 0
    %963 = vrot.lane.b32.xlu0 %v860, 32
    %v964 = vpop.permute.xlu0 %963
    %v967 = vsel %vm267, %v961, %v964
    %v968 = vld [vmem:[%s6] sm:$0xf]
    %v969 = vld [vmem:[%s6 + $0x4] sm:$0xf]
    %v970 = vld [vmem:[%s6 + $0x8] sm:$0xf]
    %v971 = vld [vmem:[%s6 + $0xc] sm:$0xf]
    %v972 = vld [vmem:[%s6 + $0x10] sm:$0xf]
    %v973 = vld [vmem:[%s6 + $0x14] sm:$0xf]
    %v974 = vld [vmem:[%s6 + $0x18] sm:$0xf]
    %v975 = vld [vmem:[%s6 + $0x1c] sm:$0xf]
    %v976 = vld [vmem:[%s7] sm:$0x1]
    %v978 = vlaneseq
    %v979 = vshrl.u32 %v978, 7
    %v980 = vsub.s32 0, %v979
    %v981 = vrot.slane %v976, %v980
    %v991 = vunpack.c.l.b16 %v968
    %v992 = vunpack.c.l.b16 %v969
    %v993 = vunpack.c.l.b16 %v970
    %v994 = vunpack.c.l.b16 %v971
    %v995 = vunpack.c.l.b16 %v972
    %v996 = vunpack.c.l.b16 %v973
    %v997 = vunpack.c.l.b16 %v974
    %v998 = vunpack.c.l.b16 %v975
    %v999 = vpack.c.b16 %v992, %v991
    %v1000 = vpack.c.b16 %v994, %v993
    %v1001 = vpack.c.b16 %v996, %v995
    %v1002 = vpack.c.b16 %v998, %v997
    %v1007 = vsel %vm427, %v967, 0
    %1009 = vmatprep.subr.bf16.mxu0 0
    %1010 = vmatpush1.bf16.msra.mxu0 0
    %1011 = vmatprep.subr.bf16.mxu0 0
    %1012 = vmatpush1.bf16.msra.mxu0 0
    %1013 = vmatprep.subr.bf16.mxu0 0
    %1014 = vmatpush1.bf16.msra.mxu0 0
    %1015 = vmatprep.subr.bf16.mxu0 0
    %1016 = vmatpush1.bf16.msra.mxu0 0
    %1017 = vmatprep.subr.bf16.mxu0 0
    %1018 = vmatpush1.bf16.msra.mxu0 %v1002
    %1019 = vmatprep.subr.bf16.mxu0 0
    %1020 = vmatpush1.bf16.msra.mxu0 %v1001
    %1021 = vmatprep.subr.bf16.mxu0 0
    %1022 = vmatpush1.bf16.msra.mxu0 %v1000
    %1023 = vmatprep.subr.bf16.mxu0 0
    %1024 = vmatpush1.bf16.msra.mxu0 %v999
    %1025 = vmatprep.subr.bf16.mxu0 0
    %1026 = vmatpush2.bf16.msra.mxu0 0
    %1027 = vmatprep.subr.bf16.mxu0 0
    %1028 = vmatpush2.bf16.msra.mxu0 0
    %1029 = vmatprep.subr.bf16.mxu0 0
    %1030 = vmatpush2.bf16.msra.mxu0 0
    %1031 = vmatprep.subr.bf16.mxu0 0
    %1032 = vmatpush2.bf16.msra.mxu0 0
    %1033 = vmatprep.subr.bf16.mxu0 0
    %1034 = vmatpush2.bf16.msra.mxu0 0
    %1035 = vmatprep.subr.bf16.mxu0 0
    %1036 = vmatpush2.bf16.msra.mxu0 0
    %1037 = vmatprep.subr.bf16.mxu0 0
    %1038 = vmatpush2.bf16.msra.mxu0 0
    %1039 = vmatprep.subr.bf16.mxu0 0
    %1040 = vmatpush2.bf16.msra.mxu0 0
    %1041 = vmatprep.mubr.bf16.mxu0 0
    %1042 = vmatmul.mubr.bf16.gmra.mxu0 %v1007
    %v1043 = vpop.f32.mrf.mxu0
    %v1044 = vadd.f32 %v981, %v1043
    %v1045 = vpop.f32.mrf.mxu0
    %v1046 = vpop.f32.mrf.mxu0
    %v1047 = vadd.f32 %v981, %v1046
    %v1048 = vpop.f32.mrf.mxu0
    %1049 = vdwg.mxu0
    %v1050 = vtanh.pop %v1044
    %v1051 = vtanh.pop %v1047
    %v1052 = vpack.c.bf16 %v1051, %v1050
    %v1053 = vsel %vm959, %v1052, %v860
    %v1054 = vsel %vm959, %v1052, 0
    %v1056 = vunpack.c.l.b16 %v1054
    %v1057 = vunpack.c.h.b16 %v1054
    %v1058 = vpack.c.b16 %v1056, %v1056
    %v1059 = vpack.c.b16 %v1057, %v1057
    %s1062 = scalar_lea.vmem [#allocation9], 24
    %1063 = vst.msk [vmem:[%s1062] sm:$0xf] %vm483, %v1058
    %1064 = vst.msk [vmem:[%s1062 + $0x4] sm:$0xf] %vm483, %v1059
    %vm1065 = vcmp.gt.s32.totalorder %v284, 4
    %vm1066 = vcmp.gt.s32.totalorder %v285, 4
    %s1067 = scalar_lea.vmem [#allocation2], 64
    %v1068 = vld [vmem:[%s1067] sm:$0xff]
    %v1069 = vld [vmem:[%s1067 + $0x8] sm:$0xff]
    %v1070 = vld [vmem:[#allocation8] sm:$0xf]
    %v1071 = vld [vmem:[#allocation8 + $0x4] sm:$0xf]
    %v1072 = vld [vmem:[#allocation8 + $0x8] sm:$0xf]
    %v1073 = vld [vmem:[#allocation8 + $0xc] sm:$0xf]
    %v1078 = vunpack.c.l.b16 %v1070
    %v1079 = vunpack.c.l.b16 %v1071
    %v1080 = vunpack.c.l.b16 %v1072
    %v1081 = vunpack.c.l.b16 %v1073
    %v1082 = vpack.c.b16 %v1079, %v1078
    %v1083 = vpack.c.b16 %v1081, %v1080
    %v1087 = vsel %vm267, %v960, 0
    %1089 = vmatprep.subr.bf16.mxu0 0
    %1090 = vmatpush1.bf16.msra.mxu0 0
    %1091 = vmatprep.subr.bf16.mxu0 0
    %1092 = vmatpush1.bf16.msra.mxu0 0
    %1093 = vmatprep.subr.bf16.mxu0 0
    %1094 = vmatpush1.bf16.msra.mxu0 0
    %1095 = vmatprep.subr.bf16.mxu0 0
    %1096 = vmatpush1.bf16.msra.mxu0 0
    %1097 = vmatprep.subr.bf16.mxu0 0
    %1098 = vmatpush1.bf16.msra.mxu0 0
    %1099 = vmatprep.subr.bf16.mxu0 0
    %1100 = vmatpush1.bf16.msra.mxu0 0
    %1101 = vmatprep.subr.bf16.mxu0 0
    %1102 = vmatpush1.bf16.msra.mxu0 %v1083
    %1103 = vmatprep.subr.bf16.mxu0 0
    %1104 = vmatpush1.bf16.msra.mxu0 %v1082
    %1105 = vmatprep.subr.bf16.mxu0 0
    %1106 = vmatpush2.bf16.msra.mxu0 0
    %1107 = vmatprep.subr.bf16.mxu0 0
    %1108 = vmatpush2.bf16.msra.mxu0 0
    %1109 = vmatprep.subr.bf16.mxu0 0
    %1110 = vmatpush2.bf16.msra.mxu0 0
    %1111 = vmatprep.subr.bf16.mxu0 0
    %1112 = vmatpush2.bf16.msra.mxu0 0
    %1113 = vmatprep.subr.bf16.mxu0 0
    %1114 = vmatpush2.bf16.msra.mxu0 0
    %1115 = vmatprep.subr.bf16.mxu0 0
    %1116 = vmatpush2.bf16.msra.mxu0 0
    %1117 = vmatprep.subr.bf16.mxu0 0
    %1118 = vmatpush2.bf16.msra.mxu0 0
    %1119 = vmatprep.subr.bf16.mxu0 0
    %1120 = vmatpush2.bf16.msra.mxu0 0
    %1121 = vmatprep.mubr.bf16.mxu0 0
    %1122 = vmatmul.mubr.bf16.gmra.mxu0 %v1087
    %v1123 = vpop.f32.mrf.mxu0
    %v1124 = vadd.f32 0.0, %v1123
    %v1125 = vpop.f32.mrf.mxu0
    %v1126 = vpop.f32.mrf.mxu0
    %v1127 = vadd.f32 0.0, %v1126
    %v1128 = vpop.f32.mrf.mxu0
    %1129 = vdwg.mxu0
    %v1130 = vadd.f32 %v1068, %v1124
    %v1131 = vadd.f32 %v1069, %v1127
    %v1132 = vtanh.pop %v1130
    %v1133 = vtanh.pop %v1131
    %v1134 = vpack.c.bf16 %v1133, %v1132
    %v1135 = vsel %vm1065, 1, 0
    %v1136 = vsel %vm1066, 1, 0
    %1137 = vset.pattern.permute.xlu0 0
    %1138 = vperm.xlu0 %1137, %v1135
    %v1139 = vpop.permute.xlu0 %1138
    %1140 = vset.pattern.permute.xlu0 0
    %1141 = vperm.xlu0 %1140, %v1136
    %v1142 = vpop.permute.xlu0 %1141
    %vm1143 = vcmp.eq.s32.totalorder %v1139, 1
    %vm1144 = vcmp.eq.s32.totalorder %v1142, 1
    %vm1145 = vmpackc.low %vm1143, %vm1143
    %vm1146 = vmpackc.low %vm1144, %vm1144
    %v1147 = vsel %vm1145, 65537, 0
    %v1148 = vsel %vm1146, 65537, 0
    %v1149 = vunpack.c.l.b16 %v1147
    %v1150 = vunpack.c.l.b16 %v1148
    %v1151 = vpack.c.b16 %v1150, %v1149
    %vm1152 = vcmp.ne.s16.totalorder %v1151, 0
    %v1153 = vsel %vm1152, %v1134, %v960
    %v1154 = vsel %vm1152, %v1134, 0
    %1156 = vrot.lane.b32.xlu0 %v1053, 32
    %v1157 = vpop.permute.xlu0 %1156
    %v1160 = vsel %vm267, %v1154, %v1157
    %v1161 = vld [vmem:[%s6] sm:$0xf]
    %v1162 = vld [vmem:[%s6 + $0x4] sm:$0xf]
    %v1163 = vld [vmem:[%s6 + $0x8] sm:$0xf]
    %v1164 = vld [vmem:[%s6 + $0xc] sm:$0xf]
    %v1165 = vld [vmem:[%s6 + $0x10] sm:$0xf]
    %v1166 = vld [vmem:[%s6 + $0x14] sm:$0xf]
    %v1167 = vld [vmem:[%s6 + $0x18] sm:$0xf]
    %v1168 = vld [vmem:[%s6 + $0x1c] sm:$0xf]
    %v1169 = vld [vmem:[%s7] sm:$0x1]
    %v1171 = vlaneseq
    %v1172 = vshrl.u32 %v1171, 7
    %v1173 = vsub.s32 0, %v1172
    %v1174 = vrot.slane %v1169, %v1173
    %v1184 = vunpack.c.l.b16 %v1161
    %v1185 = vunpack.c.l.b16 %v1162
    %v1186 = vunpack.c.l.b16 %v1163
    %v1187 = vunpack.c.l.b16 %v1164
    %v1188 = vunpack.c.l.b16 %v1165
    %v1189 = vunpack.c.l.b16 %v1166
    %v1190 = vunpack.c.l.b16 %v1167
    %v1191 = vunpack.c.l.b16 %v1168
    %v1192 = vpack.c.b16 %v1185, %v1184
    %v1193 = vpack.c.b16 %v1187, %v1186
    %v1194 = vpack.c.b16 %v1189, %v1188
    %v1195 = vpack.c.b16 %v1191, %v1190
    %v1200 = vsel %vm427, %v1160, 0
    %1202 = vmatprep.subr.bf16.mxu0 0
    %1203 = vmatpush1.bf16.msra.mxu0 0
    %1204 = vmatprep.subr.bf16.mxu0 0
    %1205 = vmatpush1.bf16.msra.mxu0 0
    %1206 = vmatprep.subr.bf16.mxu0 0
    %1207 = vmatpush1.bf16.msra.mxu0 0
    %1208 = vmatprep.subr.bf16.mxu0 0
    %1209 = vmatpush1.bf16.msra.mxu0 0
    %1210 = vmatprep.subr.bf16.mxu0 0
    %1211 = vmatpush1.bf16.msra.mxu0 %v1195
    %1212 = vmatprep.subr.bf16.mxu0 0
    %1213 = vmatpush1.bf16.msra.mxu0 %v1194
    %1214 = vmatprep.subr.bf16.mxu0 0
    %1215 = vmatpush1.bf16.msra.mxu0 %v1193
    %1216 = vmatprep.subr.bf16.mxu0 0
    %1217 = vmatpush1.bf16.msra.mxu0 %v1192
    %1218 = vmatprep.subr.bf16.mxu0 0
    %1219 = vmatpush2.bf16.msra.mxu0 0
    %1220 = vmatprep.subr.bf16.mxu0 0
    %1221 = vmatpush2.bf16.msra.mxu0 0
    %1222 = vmatprep.subr.bf16.mxu0 0
    %1223 = vmatpush2.bf16.msra.mxu0 0
    %1224 = vmatprep.subr.bf16.mxu0 0
    %1225 = vmatpush2.bf16.msra.mxu0 0
    %1226 = vmatprep.subr.bf16.mxu0 0
    %1227 = vmatpush2.bf16.msra.mxu0 0
    %1228 = vmatprep.subr.bf16.mxu0 0
    %1229 = vmatpush2.bf16.msra.mxu0 0
    %1230 = vmatprep.subr.bf16.mxu0 0
    %1231 = vmatpush2.bf16.msra.mxu0 0
    %1232 = vmatprep.subr.bf16.mxu0 0
    %1233 = vmatpush2.bf16.msra.mxu0 0
    %1234 = vmatprep.mubr.bf16.mxu0 0
    %1235 = vmatmul.mubr.bf16.gmra.mxu0 %v1200
    %v1236 = vpop.f32.mrf.mxu0
    %v1237 = vadd.f32 %v1174, %v1236
    %v1238 = vpop.f32.mrf.mxu0
    %v1239 = vpop.f32.mrf.mxu0
    %v1240 = vadd.f32 %v1174, %v1239
    %v1241 = vpop.f32.mrf.mxu0
    %1242 = vdwg.mxu0
    %v1243 = vtanh.pop %v1237
    %v1244 = vtanh.pop %v1240
    %v1245 = vpack.c.bf16 %v1244, %v1243
    %v1246 = vsel %vm1152, %v1245, %v1053
    %v1247 = vsel %vm1152, %v1245, 0
    %v1249 = vunpack.c.l.b16 %v1247
    %v1250 = vunpack.c.h.b16 %v1247
    %v1251 = vpack.c.b16 %v1249, %v1249
    %v1252 = vpack.c.b16 %v1250, %v1250
    %s1255 = scalar_lea.vmem [#allocation9], 32
    %1256 = vst.msk [vmem:[%s1255] sm:$0xf] %vm483, %v1251
    %1257 = vst.msk [vmem:[%s1255 + $0x4] sm:$0xf] %vm483, %v1252
    %vm1258 = vcmp.gt.s32.totalorder %v284, 5
    %vm1259 = vcmp.gt.s32.totalorder %v285, 5
    %s1260 = scalar_lea.vmem [#allocation2], 80
    %v1261 = vld [vmem:[%s1260] sm:$0xff]
    %v1262 = vld [vmem:[%s1260 + $0x8] sm:$0xff]
    %v1263 = vld [vmem:[#allocation8] sm:$0xf]
    %v1264 = vld [vmem:[#allocation8 + $0x4] sm:$0xf]
    %v1265 = vld [vmem:[#allocation8 + $0x8] sm:$0xf]
    %v1266 = vld [vmem:[#allocation8 + $0xc] sm:$0xf]
    %v1271 = vunpack.c.l.b16 %v1263
    %v1272 = vunpack.c.l.b16 %v1264
    %v1273 = vunpack.c.l.b16 %v1265
    %v1274 = vunpack.c.l.b16 %v1266
    %v1275 = vpack.c.b16 %v1272, %v1271
    %v1276 = vpack.c.b16 %v1274, %v1273
    %v1280 = vsel %vm267, %v1153, 0
    %1282 = vmatprep.subr.bf16.mxu0 0
    %1283 = vmatpush1.bf16.msra.mxu0 0
    %1284 = vmatprep.subr.bf16.mxu0 0
    %1285 = vmatpush1.bf16.msra.mxu0 0
    %1286 = vmatprep.subr.bf16.mxu0 0
    %1287 = vmatpush1.bf16.msra.mxu0 0
    %1288 = vmatprep.subr.bf16.mxu0 0
    %1289 = vmatpush1.bf16.msra.mxu0 0
    %1290 = vmatprep.subr.bf16.mxu0 0
    %1291 = vmatpush1.bf16.msra.mxu0 0
    %1292 = vmatprep.subr.bf16.mxu0 0
    %1293 = vmatpush1.bf16.msra.mxu0 0
    %1294 = vmatprep.subr.bf16.mxu0 0
    %1295 = vmatpush1.bf16.msra.mxu0 %v1276
    %1296 = vmatprep.subr.bf16.mxu0 0
    %1297 = vmatpush1.bf16.msra.mxu0 %v1275
    %1298 = vmatprep.subr.bf16.mxu0 0
    %1299 = vmatpush2.bf16.msra.mxu0 0
    %1300 = vmatprep.subr.bf16.mxu0 0
    %1301 = vmatpush2.bf16.msra.mxu0 0
    %1302 = vmatprep.subr.bf16.mxu0 0
    %1303 = vmatpush2.bf16.msra.mxu0 0
    %1304 = vmatprep.subr.bf16.mxu0 0
    %1305 = vmatpush2.bf16.msra.mxu0 0
    %1306 = vmatprep.subr.bf16.mxu0 0
    %1307 = vmatpush2.bf16.msra.mxu0 0
    %1308 = vmatprep.subr.bf16.mxu0 0
    %1309 = vmatpush2.bf16.msra.mxu0 0
    %1310 = vmatprep.subr.bf16.mxu0 0
    %1311 = vmatpush2.bf16.msra.mxu0 0
    %1312 = vmatprep.subr.bf16.mxu0 0
    %1313 = vmatpush2.bf16.msra.mxu0 0
    %1314 = vmatprep.mubr.bf16.mxu0 0
    %1315 = vmatmul.mubr.bf16.gmra.mxu0 %v1280
    %v1316 = vpop.f32.mrf.mxu0
    %v1317 = vadd.f32 0.0, %v1316
    %v1318 = vpop.f32.mrf.mxu0
    %v1319 = vpop.f32.mrf.mxu0
    %v1320 = vadd.f32 0.0, %v1319
    %v1321 = vpop.f32.mrf.mxu0
    %1322 = vdwg.mxu0
    %v1323 = vadd.f32 %v1261, %v1317
    %v1324 = vadd.f32 %v1262, %v1320
    %v1325 = vtanh.pop %v1323
    %v1326 = vtanh.pop %v1324
    %v1327 = vpack.c.bf16 %v1326, %v1325
    %v1328 = vsel %vm1258, 1, 0
    %v1329 = vsel %vm1259, 1, 0
    %1330 = vset.pattern.permute.xlu0 0
    %1331 = vperm.xlu0 %1330, %v1328
    %v1332 = vpop.permute.xlu0 %1331
    %1333 = vset.pattern.permute.xlu0 0
    %1334 = vperm.xlu0 %1333, %v1329
    %v1335 = vpop.permute.xlu0 %1334
    %vm1336 = vcmp.eq.s32.totalorder %v1332, 1
    %vm1337 = vcmp.eq.s32.totalorder %v1335, 1
    %vm1338 = vmpackc.low %vm1336, %vm1336
    %vm1339 = vmpackc.low %vm1337, %vm1337
    %v1340 = vsel %vm1338, 65537, 0
    %v1341 = vsel %vm1339, 65537, 0
    %v1342 = vunpack.c.l.b16 %v1340
    %v1343 = vunpack.c.l.b16 %v1341
    %v1344 = vpack.c.b16 %v1343, %v1342
    %vm1345 = vcmp.ne.s16.totalorder %v1344, 0
    %v1346 = vsel %vm1345, %v1327, %v1153
    %v1347 = vsel %vm1345, %v1327, 0
    %1349 = vrot.lane.b32.xlu0 %v1246, 32
    %v1350 = vpop.permute.xlu0 %1349
    %v1353 = vsel %vm267, %v1347, %v1350
    %v1354 = vld [vmem:[%s6] sm:$0xf]
    %v1355 = vld [vmem:[%s6 + $0x4] sm:$0xf]
    %v1356 = vld [vmem:[%s6 + $0x8] sm:$0xf]
    %v1357 = vld [vmem:[%s6 + $0xc] sm:$0xf]
    %v1358 = vld [vmem:[%s6 + $0x10] sm:$0xf]
    %v1359 = vld [vmem:[%s6 + $0x14] sm:$0xf]
    %v1360 = vld [vmem:[%s6 + $0x18] sm:$0xf]
    %v1361 = vld [vmem:[%s6 + $0x1c] sm:$0xf]
    %v1362 = vld [vmem:[%s7] sm:$0x1]
    %v1364 = vlaneseq
    %v1365 = vshrl.u32 %v1364, 7
    %v1366 = vsub.s32 0, %v1365
    %v1367 = vrot.slane %v1362, %v1366
    %v1377 = vunpack.c.l.b16 %v1354
    %v1378 = vunpack.c.l.b16 %v1355
    %v1379 = vunpack.c.l.b16 %v1356
    %v1380 = vunpack.c.l.b16 %v1357
    %v1381 = vunpack.c.l.b16 %v1358
    %v1382 = vunpack.c.l.b16 %v1359
    %v1383 = vunpack.c.l.b16 %v1360
    %v1384 = vunpack.c.l.b16 %v1361
    %v1385 = vpack.c.b16 %v1378, %v1377
    %v1386 = vpack.c.b16 %v1380, %v1379
    %v1387 = vpack.c.b16 %v1382, %v1381
    %v1388 = vpack.c.b16 %v1384, %v1383
    %v1393 = vsel %vm427, %v1353, 0
    %1395 = vmatprep.subr.bf16.mxu0 0
    %1396 = vmatpush1.bf16.msra.mxu0 0
    %1397 = vmatprep.subr.bf16.mxu0 0
    %1398 = vmatpush1.bf16.msra.mxu0 0
    %1399 = vmatprep.subr.bf16.mxu0 0
    %1400 = vmatpush1.bf16.msra.mxu0 0
    %1401 = vmatprep.subr.bf16.mxu0 0
    %1402 = vmatpush1.bf16.msra.mxu0 0
    %1403 = vmatprep.subr.bf16.mxu0 0
    %1404 = vmatpush1.bf16.msra.mxu0 %v1388
    %1405 = vmatprep.subr.bf16.mxu0 0
    %1406 = vmatpush1.bf16.msra.mxu0 %v1387
    %1407 = vmatprep.subr.bf16.mxu0 0
    %1408 = vmatpush1.bf16.msra.mxu0 %v1386
    %1409 = vmatprep.subr.bf16.mxu0 0
    %1410 = vmatpush1.bf16.msra.mxu0 %v1385
    %1411 = vmatprep.subr.bf16.mxu0 0
    %1412 = vmatpush2.bf16.msra.mxu0 0
    %1413 = vmatprep.subr.bf16.mxu0 0
    %1414 = vmatpush2.bf16.msra.mxu0 0
    %1415 = vmatprep.subr.bf16.mxu0 0
    %1416 = vmatpush2.bf16.msra.mxu0 0
    %1417 = vmatprep.subr.bf16.mxu0 0
    %1418 = vmatpush2.bf16.msra.mxu0 0
    %1419 = vmatprep.subr.bf16.mxu0 0
    %1420 = vmatpush2.bf16.msra.mxu0 0
    %1421 = vmatprep.subr.bf16.mxu0 0
    %1422 = vmatpush2.bf16.msra.mxu0 0
    %1423 = vmatprep.subr.bf16.mxu0 0
    %1424 = vmatpush2.bf16.msra.mxu0 0
    %1425 = vmatprep.subr.bf16.mxu0 0
    %1426 = vmatpush2.bf16.msra.mxu0 0
    %1427 = vmatprep.mubr.bf16.mxu0 0
    %1428 = vmatmul.mubr.bf16.gmra.mxu0 %v1393
    %v1429 = vpop.f32.mrf.mxu0
    %v1430 = vadd.f32 %v1367, %v1429
    %v1431 = vpop.f32.mrf.mxu0
    %v1432 = vpop.f32.mrf.mxu0
    %v1433 = vadd.f32 %v1367, %v1432
    %v1434 = vpop.f32.mrf.mxu0
    %1435 = vdwg.mxu0
    %v1436 = vtanh.pop %v1430
    %v1437 = vtanh.pop %v1433
    %v1438 = vpack.c.bf16 %v1437, %v1436
    %v1439 = vsel %vm1345, %v1438, %v1246
    %v1440 = vsel %vm1345, %v1438, 0
    %v1442 = vunpack.c.l.b16 %v1440
    %v1443 = vunpack.c.h.b16 %v1440
    %v1444 = vpack.c.b16 %v1442, %v1442
    %v1445 = vpack.c.b16 %v1443, %v1443
    %s1448 = scalar_lea.vmem [#allocation9], 40
    %1449 = vst.msk [vmem:[%s1448] sm:$0xf] %vm483, %v1444
    %1450 = vst.msk [vmem:[%s1448 + $0x4] sm:$0xf] %vm483, %v1445
    %vm1451 = vcmp.gt.s32.totalorder %v284, 6
    %vm1452 = vcmp.gt.s32.totalorder %v285, 6
    %s1453 = scalar_lea.vmem [#allocation2], 96
    %v1454 = vld [vmem:[%s1453] sm:$0xff]
    %v1455 = vld [vmem:[%s1453 + $0x8] sm:$0xff]
    %v1456 = vld [vmem:[#allocation8] sm:$0xf]
    %v1457 = vld [vmem:[#allocation8 + $0x4] sm:$0xf]
    %v1458 = vld [vmem:[#allocation8 + $0x8] sm:$0xf]
    %v1459 = vld [vmem:[#allocation8 + $0xc] sm:$0xf]
    %v1464 = vunpack.c.l.b16 %v1456
    %v1465 = vunpack.c.l.b16 %v1457
    %v1466 = vunpack.c.l.b16 %v1458
    %v1467 = vunpack.c.l.b16 %v1459
    %v1468 = vpack.c.b16 %v1465, %v1464
    %v1469 = vpack.c.b16 %v1467, %v1466
    %v1473 = vsel %vm267, %v1346, 0
    %1475 = vmatprep.subr.bf16.mxu0 0
    %1476 = vmatpush1.bf16.msra.mxu0 0
    %1477 = vmatprep.subr.bf16.mxu0 0
    %1478 = vmatpush1.bf16.msra.mxu0 0
    %1479 = vmatprep.subr.bf16.mxu0 0
    %1480 = vmatpush1.bf16.msra.mxu0 0
    %1481 = vmatprep.subr.bf16.mxu0 0
    %1482 = vmatpush1.bf16.msra.mxu0 0
    %1483 = vmatprep.subr.bf16.mxu0 0
    %1484 = vmatpush1.bf16.msra.mxu0 0
    %1485 = vmatprep.subr.bf16.mxu0 0
    %1486 = vmatpush1.bf16.msra.mxu0 0
    %1487 = vmatprep.subr.bf16.mxu0 0
    %1488 = vmatpush1.bf16.msra.mxu0 %v1469
    %1489 = vmatprep.subr.bf16.mxu0 0
    %1490 = vmatpush1.bf16.msra.mxu0 %v1468
    %1491 = vmatprep.subr.bf16.mxu0 0
    %1492 = vmatpush2.bf16.msra.mxu0 0
    %1493 = vmatprep.subr.bf16.mxu0 0
    %1494 = vmatpush2.bf16.msra.mxu0 0
    %1495 = vmatprep.subr.bf16.mxu0 0
    %1496 = vmatpush2.bf16.msra.mxu0 0
    %1497 = vmatprep.subr.bf16.mxu0 0
    %1498 = vmatpush2.bf16.msra.mxu0 0
    %1499 = vmatprep.subr.bf16.mxu0 0
    %1500 = vmatpush2.bf16.msra.mxu0 0
    %1501 = vmatprep.subr.bf16.mxu0 0
    %1502 = vmatpush2.bf16.msra.mxu0 0
    %1503 = vmatprep.subr.bf16.mxu0 0
    %1504 = vmatpush2.bf16.msra.mxu0 0
    %1505 = vmatprep.subr.bf16.mxu0 0
    %1506 = vmatpush2.bf16.msra.mxu0 0
    %1507 = vmatprep.mubr.bf16.mxu0 0
    %1508 = vmatmul.mubr.bf16.gmra.mxu0 %v1473
    %v1509 = vpop.f32.mrf.mxu0
    %v1510 = vadd.f32 0.0, %v1509
    %v1511 = vpop.f32.mrf.mxu0
    %v1512 = vpop.f32.mrf.mxu0
    %v1513 = vadd.f32 0.0, %v1512
    %v1514 = vpop.f32.mrf.mxu0
    %1515 = vdwg.mxu0
    %v1516 = vadd.f32 %v1454, %v1510
    %v1517 = vadd.f32 %v1455, %v1513
    %v1518 = vtanh.pop %v1516
    %v1519 = vtanh.pop %v1517
    %v1520 = vpack.c.bf16 %v1519, %v1518
    %v1521 = vsel %vm1451, 1, 0
    %v1522 = vsel %vm1452, 1, 0
    %1523 = vset.pattern.permute.xlu0 0
    %1524 = vperm.xlu0 %1523, %v1521
    %v1525 = vpop.permute.xlu0 %1524
    %1526 = vset.pattern.permute.xlu0 0
    %1527 = vperm.xlu0 %1526, %v1522
    %v1528 = vpop.permute.xlu0 %1527
    %vm1529 = vcmp.eq.s32.totalorder %v1525, 1
    %vm1530 = vcmp.eq.s32.totalorder %v1528, 1
    %vm1531 = vmpackc.low %vm1529, %vm1529
    %vm1532 = vmpackc.low %vm1530, %vm1530
    %v1533 = vsel %vm1531, 65537, 0
    %v1534 = vsel %vm1532, 65537, 0
    %v1535 = vunpack.c.l.b16 %v1533
    %v1536 = vunpack.c.l.b16 %v1534
    %v1537 = vpack.c.b16 %v1536, %v1535
    %vm1538 = vcmp.ne.s16.totalorder %v1537, 0
    %v1539 = vsel %vm1538, %v1520, %v1346
    %v1540 = vsel %vm1538, %v1520, 0
    %1542 = vrot.lane.b32.xlu0 %v1439, 32
    %v1543 = vpop.permute.xlu0 %1542
    %v1546 = vsel %vm267, %v1540, %v1543
    %v1547 = vld [vmem:[%s6] sm:$0xf]
    %v1548 = vld [vmem:[%s6 + $0x4] sm:$0xf]
    %v1549 = vld [vmem:[%s6 + $0x8] sm:$0xf]
    %v1550 = vld [vmem:[%s6 + $0xc] sm:$0xf]
    %v1551 = vld [vmem:[%s6 + $0x10] sm:$0xf]
    %v1552 = vld [vmem:[%s6 + $0x14] sm:$0xf]
    %v1553 = vld [vmem:[%s6 + $0x18] sm:$0xf]
    %v1554 = vld [vmem:[%s6 + $0x1c] sm:$0xf]
    %v1555 = vld [vmem:[%s7] sm:$0x1]
    %v1557 = vlaneseq
    %v1558 = vshrl.u32 %v1557, 7
    %v1559 = vsub.s32 0, %v1558
    %v1560 = vrot.slane %v1555, %v1559
    %v1570 = vunpack.c.l.b16 %v1547
    %v1571 = vunpack.c.l.b16 %v1548
    %v1572 = vunpack.c.l.b16 %v1549
    %v1573 = vunpack.c.l.b16 %v1550
    %v1574 = vunpack.c.l.b16 %v1551
    %v1575 = vunpack.c.l.b16 %v1552
    %v1576 = vunpack.c.l.b16 %v1553
    %v1577 = vunpack.c.l.b16 %v1554
    %v1578 = vpack.c.b16 %v1571, %v1570
    %v1579 = vpack.c.b16 %v1573, %v1572
    %v1580 = vpack.c.b16 %v1575, %v1574
    %v1581 = vpack.c.b16 %v1577, %v1576
    %v1586 = vsel %vm427, %v1546, 0
    %1588 = vmatprep.subr.bf16.mxu0 0
    %1589 = vmatpush1.bf16.msra.mxu0 0
    %1590 = vmatprep.subr.bf16.mxu0 0
    %1591 = vmatpush1.bf16.msra.mxu0 0
    %1592 = vmatprep.subr.bf16.mxu0 0
    %1593 = vmatpush1.bf16.msra.mxu0 0
    %1594 = vmatprep.subr.bf16.mxu0 0
    %1595 = vmatpush1.bf16.msra.mxu0 0
    %1596 = vmatprep.subr.bf16.mxu0 0
    %1597 = vmatpush1.bf16.msra.mxu0 %v1581
    %1598 = vmatprep.subr.bf16.mxu0 0
    %1599 = vmatpush1.bf16.msra.mxu0 %v1580
    %1600 = vmatprep.subr.bf16.mxu0 0
    %1601 = vmatpush1.bf16.msra.mxu0 %v1579
    %1602 = vmatprep.subr.bf16.mxu0 0
    %1603 = vmatpush1.bf16.msra.mxu0 %v1578
    %1604 = vmatprep.subr.bf16.mxu0 0
    %1605 = vmatpush2.bf16.msra.mxu0 0
    %1606 = vmatprep.subr.bf16.mxu0 0
    %1607 = vmatpush2.bf16.msra.mxu0 0
    %1608 = vmatprep.subr.bf16.mxu0 0
    %1609 = vmatpush2.bf16.msra.mxu0 0
    %1610 = vmatprep.subr.bf16.mxu0 0
    %1611 = vmatpush2.bf16.msra.mxu0 0
    %1612 = vmatprep.subr.bf16.mxu0 0
    %1613 = vmatpush2.bf16.msra.mxu0 0
    %1614 = vmatprep.subr.bf16.mxu0 0
    %1615 = vmatpush2.bf16.msra.mxu0 0
    %1616 = vmatprep.subr.bf16.mxu0 0
    %1617 = vmatpush2.bf16.msra.mxu0 0
    %1618 = vmatprep.subr.bf16.mxu0 0
    %1619 = vmatpush2.bf16.msra.mxu0 0
    %1620 = vmatprep.mubr.bf16.mxu0 0
    %1621 = vmatmul.mubr.bf16.gmra.mxu0 %v1586
    %v1622 = vpop.f32.mrf.mxu0
    %v1623 = vadd.f32 %v1560, %v1622
    %v1624 = vpop.f32.mrf.mxu0
    %v1625 = vpop.f32.mrf.mxu0
    %v1626 = vadd.f32 %v1560, %v1625
    %v1627 = vpop.f32.mrf.mxu0
    %1628 = vdwg.mxu0
    %v1629 = vtanh.pop %v1623
    %v1630 = vtanh.pop %v1626
    %v1631 = vpack.c.bf16 %v1630, %v1629
    %v1632 = vsel %vm1538, %v1631, %v1439
    %v1633 = vsel %vm1538, %v1631, 0
    %v1635 = vunpack.c.l.b16 %v1633
    %v1636 = vunpack.c.h.b16 %v1633
    %v1637 = vpack.c.b16 %v1635, %v1635
    %v1638 = vpack.c.b16 %v1636, %v1636
    %s1641 = scalar_lea.vmem [#allocation9], 48
    %1642 = vst.msk [vmem:[%s1641] sm:$0xf] %vm483, %v1637
    %1643 = vst.msk [vmem:[%s1641 + $0x4] sm:$0xf] %vm483, %v1638
    %vm1644 = vcmp.gt.s32.totalorder %v284, 7
    %vm1645 = vcmp.gt.s32.totalorder %v285, 7
    %s1646 = scalar_lea.vmem [#allocation2], 112
    %v1647 = vld [vmem:[%s1646] sm:$0xff]
    %v1648 = vld [vmem:[%s1646 + $0x8] sm:$0xff]
    %v1649 = vld [vmem:[#allocation8] sm:$0xf]
    %v1650 = vld [vmem:[#allocation8 + $0x4] sm:$0xf]
    %v1651 = vld [vmem:[#allocation8 + $0x8] sm:$0xf]
    %v1652 = vld [vmem:[#allocation8 + $0xc] sm:$0xf]
    %v1657 = vunpack.c.l.b16 %v1649
    %v1658 = vunpack.c.l.b16 %v1650
    %v1659 = vunpack.c.l.b16 %v1651
    %v1660 = vunpack.c.l.b16 %v1652
    %v1661 = vpack.c.b16 %v1658, %v1657
    %v1662 = vpack.c.b16 %v1660, %v1659
    %v1666 = vsel %vm267, %v1539, 0
    %1668 = vmatprep.subr.bf16.mxu0 0
    %1669 = vmatpush1.bf16.msra.mxu0 0
    %1670 = vmatprep.subr.bf16.mxu0 0
    %1671 = vmatpush1.bf16.msra.mxu0 0
    %1672 = vmatprep.subr.bf16.mxu0 0
    %1673 = vmatpush1.bf16.msra.mxu0 0
    %1674 = vmatprep.subr.bf16.mxu0 0
    %1675 = vmatpush1.bf16.msra.mxu0 0
    %1676 = vmatprep.subr.bf16.mxu0 0
    %1677 = vmatpush1.bf16.msra.mxu0 0
    %1678 = vmatprep.subr.bf16.mxu0 0
    %1679 = vmatpush1.bf16.msra.mxu0 0
    %1680 = vmatprep.subr.bf16.mxu0 0
    %1681 = vmatpush1.bf16.msra.mxu0 %v1662
    %1682 = vmatprep.subr.bf16.mxu0 0
    %1683 = vmatpush1.bf16.msra.mxu0 %v1661
    %1684 = vmatprep.subr.bf16.mxu0 0
    %1685 = vmatpush2.bf16.msra.mxu0 0
    %1686 = vmatprep.subr.bf16.mxu0 0
    %1687 = vmatpush2.bf16.msra.mxu0 0
    %1688 = vmatprep.subr.bf16.mxu0 0
    %1689 = vmatpush2.bf16.msra.mxu0 0
    %1690 = vmatprep.subr.bf16.mxu0 0
    %1691 = vmatpush2.bf16.msra.mxu0 0
    %1692 = vmatprep.subr.bf16.mxu0 0
    %1693 = vmatpush2.bf16.msra.mxu0 0
    %1694 = vmatprep.subr.bf16.mxu0 0
    %1695 = vmatpush2.bf16.msra.mxu0 0
    %1696 = vmatprep.subr.bf16.mxu0 0
    %1697 = vmatpush2.bf16.msra.mxu0 0
    %1698 = vmatprep.subr.bf16.mxu0 0
    %1699 = vmatpush2.bf16.msra.mxu0 0
    %1700 = vmatprep.mubr.bf16.mxu0 0
    %1701 = vmatmul.mubr.bf16.gmra.mxu0 %v1666
    %v1702 = vpop.f32.mrf.mxu0
    %v1703 = vadd.f32 0.0, %v1702
    %v1704 = vpop.f32.mrf.mxu0
    %v1705 = vpop.f32.mrf.mxu0
    %v1706 = vadd.f32 0.0, %v1705
    %v1707 = vpop.f32.mrf.mxu0
    %1708 = vdwg.mxu0
    %v1709 = vadd.f32 %v1647, %v1703
    %v1710 = vadd.f32 %v1648, %v1706
    %v1711 = vtanh.pop %v1709
    %v1712 = vtanh.pop %v1710
    %v1713 = vpack.c.bf16 %v1712, %v1711
    %v1714 = vsel %vm1644, 1, 0
    %v1715 = vsel %vm1645, 1, 0
    %1716 = vset.pattern.permute.xlu0 0
    %1717 = vperm.xlu0 %1716, %v1714
    %v1718 = vpop.permute.xlu0 %1717
    %1719 = vset.pattern.permute.xlu0 0
    %1720 = vperm.xlu0 %1719, %v1715
    %v1721 = vpop.permute.xlu0 %1720
    %vm1722 = vcmp.eq.s32.totalorder %v1718, 1
    %vm1723 = vcmp.eq.s32.totalorder %v1721, 1
    %vm1724 = vmpackc.low %vm1722, %vm1722
    %vm1725 = vmpackc.low %vm1723, %vm1723
    %v1726 = vsel %vm1724, 65537, 0
    %v1727 = vsel %vm1725, 65537, 0
    %v1728 = vunpack.c.l.b16 %v1726
    %v1729 = vunpack.c.l.b16 %v1727
    %v1730 = vpack.c.b16 %v1729, %v1728
    %vm1731 = vcmp.ne.s16.totalorder %v1730, 0
    %v1732 = vsel %vm1731, %v1713, 0
    %1734 = vrot.lane.b32.xlu0 %v1632, 32
    %v1735 = vpop.permute.xlu0 %1734
    %v1738 = vsel %vm267, %v1732, %v1735
    %v1739 = vld [vmem:[%s6] sm:$0xf]
    %v1740 = vld [vmem:[%s6 + $0x4] sm:$0xf]
    %v1741 = vld [vmem:[%s6 + $0x8] sm:$0xf]
    %v1742 = vld [vmem:[%s6 + $0xc] sm:$0xf]
    %v1743 = vld [vmem:[%s6 + $0x10] sm:$0xf]
    %v1744 = vld [vmem:[%s6 + $0x14] sm:$0xf]
    %v1745 = vld [vmem:[%s6 + $0x18] sm:$0xf]
    %v1746 = vld [vmem:[%s6 + $0x1c] sm:$0xf]
    %v1747 = vld [vmem:[%s7] sm:$0x1]
    %v1749 = vlaneseq
    %v1750 = vshrl.u32 %v1749, 7
    %v1751 = vsub.s32 0, %v1750
    %v1752 = vrot.slane %v1747, %v1751
    %v1762 = vunpack.c.l.b16 %v1739
    %v1763 = vunpack.c.l.b16 %v1740
    %v1764 = vunpack.c.l.b16 %v1741
    %v1765 = vunpack.c.l.b16 %v1742
    %v1766 = vunpack.c.l.b16 %v1743
    %v1767 = vunpack.c.l.b16 %v1744
    %v1768 = vunpack.c.l.b16 %v1745
    %v1769 = vunpack.c.l.b16 %v1746
    %v1770 = vpack.c.b16 %v1763, %v1762
    %v1771 = vpack.c.b16 %v1765, %v1764
    %v1772 = vpack.c.b16 %v1767, %v1766
    %v1773 = vpack.c.b16 %v1769, %v1768
    %v1778 = vsel %vm427, %v1738, 0
    %1780 = vmatprep.subr.bf16.mxu0 0
    %1781 = vmatpush1.bf16.msra.mxu0 0
    %1782 = vmatprep.subr.bf16.mxu0 0
    %1783 = vmatpush1.bf16.msra.mxu0 0
    %1784 = vmatprep.subr.bf16.mxu0 0
    %1785 = vmatpush1.bf16.msra.mxu0 0
    %1786 = vmatprep.subr.bf16.mxu0 0
    %1787 = vmatpush1.bf16.msra.mxu0 0
    %1788 = vmatprep.subr.bf16.mxu0 0
    %1789 = vmatpush1.bf16.msra.mxu0 %v1773
    %1790 = vmatprep.subr.bf16.mxu0 0
    %1791 = vmatpush1.bf16.msra.mxu0 %v1772
    %1792 = vmatprep.subr.bf16.mxu0 0
    %1793 = vmatpush1.bf16.msra.mxu0 %v1771
    %1794 = vmatprep.subr.bf16.mxu0 0
    %1795 = vmatpush1.bf16.msra.mxu0 %v1770
    %1796 = vmatprep.subr.bf16.mxu0 0
    %1797 = vmatpush2.bf16.msra.mxu0 0
    %1798 = vmatprep.subr.bf16.mxu0 0
    %1799 = vmatpush2.bf16.msra.mxu0 0
    %1800 = vmatprep.subr.bf16.mxu0 0
    %1801 = vmatpush2.bf16.msra.mxu0 0
    %1802 = vmatprep.subr.bf16.mxu0 0
    %1803 = vmatpush2.bf16.msra.mxu0 0
    %1804 = vmatprep.subr.bf16.mxu0 0
    %1805 = vmatpush2.bf16.msra.mxu0 0
    %1806 = vmatprep.subr.bf16.mxu0 0
    %1807 = vmatpush2.bf16.msra.mxu0 0
    %1808 = vmatprep.subr.bf16.mxu0 0
    %1809 = vmatpush2.bf16.msra.mxu0 0
    %1810 = vmatprep.subr.bf16.mxu0 0
    %1811 = vmatpush2.bf16.msra.mxu0 0
    %1812 = vmatprep.mubr.bf16.mxu0 0
    %1813 = vmatmul.mubr.bf16.gmra.mxu0 %v1778
    %v1814 = vpop.f32.mrf.mxu0
    %v1815 = vadd.f32 %v1752, %v1814
    %v1816 = vpop.f32.mrf.mxu0
    %v1817 = vpop.f32.mrf.mxu0
    %v1818 = vadd.f32 %v1752, %v1817
    %v1819 = vpop.f32.mrf.mxu0
    %1820 = vdwg.mxu0
    %v1821 = vtanh.pop %v1815
    %v1822 = vtanh.pop %v1818
    %v1823 = vpack.c.bf16 %v1822, %v1821
    %v1824 = vsel %vm1731, %v1823, 0
    %v1826 = vunpack.c.l.b16 %v1824
    %v1827 = vunpack.c.h.b16 %v1824
    %v1828 = vpack.c.b16 %v1826, %v1826
    %v1829 = vpack.c.b16 %v1827, %v1827
    %s1832 = scalar_lea.vmem [#allocation9], 56
    %1833 = vst.msk [vmem:[%s1832] sm:$0xf] %vm483, %v1828
    %1834 = vst.msk [vmem:[%s1832 + $0x4] sm:$0xf] %vm483, %v1829
    // Predicated region
    $region46: #{tpu_custom_call.1} parent=1 // pred_check
      _
    $region47: #{tpu_custom_call.1} parent=1 // pred_check_branch
      %1836 = sbr.rel (0) target = $region49
    $region48: #{tpu_custom_call.1} parent=1 // pred_region
      %s1838 = ssub.s32 1024, 1024
      %1839 = vsyncadd [#allocation5], %s1838
      %s1840 = sshll.u32 [#allocation9], 4
      %s1841 = int_to_ptr.vmem [resolvable:$true] %s1840
      %1846 = dma.vmem_to_hbm [thread:$0]  %s1841, 1024, %s8, [#allocation5], 64, 64, 4
    $region49: #{tpu_custom_call.1} parent=1 // pred_fallthru
      _
    // Predicated region
    $region50: #{tpu_custom_call.1} parent=1 // pred_check
      _
    $region51: #{tpu_custom_call.1} parent=1 // pred_check_branch
      %1848 = sbr.rel (0) target = $region53
    $region52: #{tpu_custom_call.1} parent=1 // pred_region
      %1849 = dma.done [#allocation5], 1024
    $region53: #{tpu_custom_call.1} parent=1 // pred_fallthru
      _
    %1850 = vsyncpa [#allocation4], 1
    %1851 = vsyncpa [#allocation7], 1
    %1852 = vsyncpa [#allocation5], 1

</llo_original>
